<compile_context>
chip_gen: v7x
topology: tpu7x:2x2x1
jax: 0.10.0
libtpu: 0.0.40
codegen_flags: <defaults>
</compile_context>

<pallas_src>
import functools

import jax
import jax.numpy as jnp
from jax.experimental import pallas as pl
from jax.experimental.pallas import tpu as pltpu

LANE = 128  # TPU lane width; node and feature dims are padded to multiples of this.


def _round_up(x, m):
    return ((x + m - 1) // m) * m


def _vmem_limit_bytes(buffer_bytes):
    """Derive vmem_limit_bytes from the resident buffers instead of a magic 64 MiB.

    Budget = pipeline copies of the resident buffers + Mosaic internal scratch
    headroom, clamped to ~85% of the physical per-core VMEM of the current chip
    (queried; conservative v7x-sized fallback if the query is unavailable).
    """
    need = 3 * int(buffer_bytes) + (16 << 20)
    try:
        cap = int(getattr(pltpu.get_tpu_info(), "vmem_capacity_bytes", 64 << 20))
    except Exception:  # pragma: no cover - defensive fallback
        cap = 64 << 20
    return int(min(need, int(cap * 0.85)))


def chebnet_fused_kernel(l_ref, x_ref, *rest, K, n_layers):
    """Fused multi-layer ChebConv forward (all layers + ReLU in one kernel).

    l_ref : [Np, Np]            bf16  scaled Laplacian L_hat (zero-padded)
    x_ref : [Np, P0]            f32   zero-padded node features
    rest  : per layer (w_ref [K, Pin_l, Pout_l] bf16, b_ref [1, Pout_l] f32),
            then o_ref [Np, P_last] f32 (lane-dense padded output).
    """
    wb = rest[:2 * n_layers]
    o_ref = rest[2 * n_layers]

    h = x_ref[...]                               # f32 recurrence / activation state

    for layer in range(n_layers):
        w_ref = wb[2 * layer]
        b_ref = wb[2 * layer + 1]

        # ---- Chebyshev recurrence + accumulated per-order projections ----
        # MXU operands bf16, accumulation f32; recurrence state stays f32.
        t_prev = h
        out = jnp.dot(t_prev.astype(jnp.bfloat16), w_ref[0],
                      preferred_element_type=jnp.float32)
        if K > 1:
            t_cur = jnp.dot(l_ref[...], t_prev.astype(jnp.bfloat16),
                            preferred_element_type=jnp.float32)
            out = out + jnp.dot(t_cur.astype(jnp.bfloat16), w_ref[1],
                                preferred_element_type=jnp.float32)
            for k in range(2, K):
                # 2x applied on the f32 MXU result (VPU slot has slack) instead of
                # dotting against a pre-scaled second copy of L_hat.
                t_next = 2.0 * jnp.dot(l_ref[...], t_cur.astype(jnp.bfloat16),
                                       preferred_element_type=jnp.float32) - t_prev
                out = out + jnp.dot(t_next.astype(jnp.bfloat16), w_ref[k],
                                    preferred_element_type=jnp.float32)
                t_prev, t_cur = t_cur, t_next

        out = out + b_ref[...]                   # [1, Pout] broadcast, f32 VPU
        if layer < n_layers - 1:
            out = jnp.maximum(out, 0.0)          # fused ReLU
            # TODO(synk): dropout omitted — F.dropout is identity with training=False.
        h = out

    o_ref[...] = h.astype(o_ref.dtype)           # lane-dense full-width store


def scaled_laplacian(edge_index, edge_weight, num_nodes, lambda_max=2.0):
    """Dense L_hat = (2/lambda_max) * (I - D^{-1/2} A D^{-1/2}) - I (plain-JAX glue).

    Matches PyG ChebConv defaults: normalization='sym', lambda_max=2.0, isolated
    nodes get deg^{-1/2}=0.
    """
    src, dst = edge_index[0], edge_index[1]
    if edge_weight is None:
        edge_weight = jnp.ones(src.shape[0], dtype=jnp.float32)
    keep = (src != dst).astype(jnp.float32)       # PyG removes self loops first
    w = edge_weight * keep
    a = jnp.zeros((num_nodes, num_nodes), jnp.float32).at[src, dst].add(w)
    deg = a.sum(axis=1)
    dinv = jnp.where(deg > 0, 1.0 / jnp.sqrt(deg), 0.0)
    a_norm = dinv[:, None] * a * dinv[None, :]
    lap = jnp.eye(num_nodes, dtype=jnp.float32) - a_norm
    return (2.0 / lambda_max) * lap - jnp.eye(num_nodes, dtype=jnp.float32)


def chebnet_forward(x, edge_index, edge_weight, params):
    """ChebNet.forward, fully fused into one pallas_call (small-graph dense path).

    params: list of (w [K, f_in_l, f_out_l] f32, b [f_out_l] f32) per layer.
    Returns [N, f_out_last] f32 (also serves as self.embedding_output).
    """
    N, f_in = x.shape
    n_layers = len(params)
    K = params[0][0].shape[0]
    f_out = params[-1][0].shape[2]

    # Lane-dense padded node dim and per-layer padded feature widths.
    Np = _round_up(N, LANE)
    dims = [f_in] + [w.shape[2] for (w, _) in params]
    pdims = [_round_up(d, LANE) for d in dims]

    # Dense scaled Laplacian, zero-padded to [Np, Np]; bf16 MXU operand.
    l_hat = scaled_laplacian(edge_index, edge_weight, N)
    l_bf = jnp.zeros((Np, Np), jnp.float32).at[:N, :N].set(l_hat).astype(jnp.bfloat16)

    # Zero-padded features and per-layer padded weights / biases (padding is
    # exactly zero by construction, which the recurrence/projection math relies on).
    x_pad = jnp.zeros((Np, pdims[0]), jnp.float32).at[:N, :f_in].set(
        x.astype(jnp.float32))

    wb_inputs = []
    in_specs = [
        pl.BlockSpec((Np, Np), lambda: (0, 0)),              # L_hat (bf16)
        pl.BlockSpec((Np, pdims[0]), lambda: (0, 0)),        # padded X (f32)
    ]
    for li, (w, b) in enumerate(params):
        fi, fo = w.shape[1], w.shape[2]
        pi, po = pdims[li], pdims[li + 1]
        wp = jnp.zeros((K, pi, po), jnp.float32).at[:, :fi, :fo].set(w)
        bp = jnp.zeros((1, po), jnp.float32).at[0, :fo].set(b)
        wb_inputs += [wp.astype(jnp.bfloat16), bp]
        in_specs += [
            pl.BlockSpec((K, pi, po), lambda: (0, 0, 0)),    # layer weights (bf16)
            pl.BlockSpec((1, po), lambda: (0, 0)),           # layer bias (f32)
        ]

    out_bytes = Np * pdims[-1] * 4
    resident = (l_bf.size * l_bf.dtype.itemsize
                + x_pad.size * x_pad.dtype.itemsize
                + sum(a.size * a.dtype.itemsize for a in wb_inputs)
                + out_bytes)

    kernel = functools.partial(chebnet_fused_kernel, K=K, n_layers=n_layers)
    out_pad = pl.pallas_call(
        kernel,
        out_shape=jax.ShapeDtypeStruct((Np, pdims[-1]), jnp.float32),
        in_specs=in_specs,
        out_specs=pl.BlockSpec((Np, pdims[-1]), lambda: (0, 0)),
        compiler_params=pltpu.CompilerParams(
            vmem_limit_bytes=_vmem_limit_bytes(resident)),
    )(l_bf, x_pad, *wb_inputs)

    return out_pad[:N, :f_out]


def chebnet_reference(x, l_hat, params):
    """Pure-JAX f32 reference for correctness checking."""
    h = x
    n_layers = len(params)
    for i, (w, b) in enumerate(params):
        kk = w.shape[0]
        t_prev = h
        out = t_prev @ w[0]
        if kk > 1:
            t_cur = l_hat @ t_prev
            out = out + t_cur @ w[1]
            for k in range(2, kk):
                t_next = 2.0 * (l_hat @ t_cur) - t_prev
                out = out + t_next @ w[k]
                t_prev, t_cur = t_cur, t_next
        out = out + b
        if i < n_layers - 1:
            out = jnp.maximum(out, 0.0)
        h = out
    return h


def glorot(key, shape):
    fan_in, fan_out = shape[-2], shape[-1]
    limit = jnp.sqrt(6.0 / (fan_in + fan_out))
    return jax.random.uniform(key, shape, jnp.float32, -limit, limit)


if __name__ == "__main__":
    key = jax.random.PRNGKey(0)
    N, in_channels, hidden_channels, out_channels, K, num_layers = 16, 8, 32, 8, 3, 2

    # Deterministic synthetic graph: bidirectional ring over N nodes.
    idx = jnp.arange(N, dtype=jnp.int32)
    src = jnp.concatenate([idx, (idx + 1) % N])
    dst = jnp.concatenate([(idx + 1) % N, idx])
    edge_index = jnp.stack([src, dst], axis=0)            # [2, 2N]
    edge_weight = None                                     # data.edge_attr is None

    k_x, k_w1, k_w2 = jax.random.split(key, 3)
    x = jax.random.normal(k_x, (N, in_channels), jnp.float32)

    # Parameters (ChebConv: K weight matrices per layer, single bias per layer).
    params = [
        (glorot(k_w1, (K, in_channels, hidden_channels)),
         jnp.zeros((hidden_channels,), jnp.float32)),
        (glorot(k_w2, (K, hidden_channels, out_channels)),
         jnp.zeros((out_channels,), jnp.float32)),
    ]

    out = chebnet_forward(x, edge_index, edge_weight, params)
    out = jax.block_until_ready(out)
    assert out.shape == (N, out_channels)
    assert bool(jnp.all(jnp.isfinite(out)))

    # Check against the pure-JAX f32 reference (loose tolerance: bf16 MXU operands).
    l_hat = scaled_laplacian(edge_index, edge_weight, N)
    ref = chebnet_reference(x, l_hat, params)
    assert bool(jnp.allclose(out, ref, atol=1e-1, rtol=1e-1)), \
        float(jnp.max(jnp.abs(out - ref)))

    print("KERNEL_OK")
</pallas_src>

<mosaic_0001>
module attributes {stable_mosaic.version = 11 : i64} {
  func.func @chebnet_fused_kernel(%arg0: memref<128x128xbf16, #tpu.memory_space<vmem>>, %arg1: memref<128x128xf32, #tpu.memory_space<vmem>>, %arg2: memref<3x128x128xbf16, #tpu.memory_space<vmem>>, %arg3: memref<1x128xf32, #tpu.memory_space<vmem>>, %arg4: memref<3x128x128xbf16, #tpu.memory_space<vmem>>, %arg5: memref<1x128xf32, #tpu.memory_space<vmem>>, %arg6: memref<128x128xf32, #tpu.memory_space<vmem>>) attributes {dimension_semantics = [], scalar_prefetch = 0 : i64, scratch_operands = 0 : i64, tpu.core_type = #tpu.core_type<tc>} {
    %c0 = arith.constant 0 : index
    %c0_0 = arith.constant 0 : index
    %0 = vector.load %arg1[%c0, %c0_0] : memref<128x128xf32, #tpu.memory_space<vmem>>, vector<128x128xf32>
    %1 = arith.truncf %0 : vector<128x128xf32> to vector<128x128xbf16>
    %c0_1 = arith.constant 0 : index
    %c0_2 = arith.constant 0 : index
    %c0_3 = arith.constant 0 : index
    %2 = vector.load %arg2[%c0_1, %c0_2, %c0_3] : memref<3x128x128xbf16, #tpu.memory_space<vmem>>, vector<1x128x128xbf16>
    %3 = vector.shape_cast %2 : vector<1x128x128xbf16> to vector<128x128xbf16>
    %cst = arith.constant dense<0.000000e+00> : vector<128x128xf32>
    %4 = tpu.matmul %1, %3, %cst {dimension_numbers = #tpu.dot_dimension_numbers<[1], [0], [0], [1], [0, 0, 1, 1], [], []>} : vector<128x128xbf16>, vector<128x128xbf16>, vector<128x128xf32> -> vector<128x128xf32>
    %c0_4 = arith.constant 0 : index
    %c0_5 = arith.constant 0 : index
    %5 = vector.load %arg0[%c0_4, %c0_5] : memref<128x128xbf16, #tpu.memory_space<vmem>>, vector<128x128xbf16>
    %6 = arith.truncf %0 : vector<128x128xf32> to vector<128x128xbf16>
    %cst_6 = arith.constant dense<0.000000e+00> : vector<128x128xf32>
    %7 = tpu.matmul %5, %6, %cst_6 {dimension_numbers = #tpu.dot_dimension_numbers<[1], [0], [0], [1], [0, 0, 1, 1], [], []>} : vector<128x128xbf16>, vector<128x128xbf16>, vector<128x128xf32> -> vector<128x128xf32>
    %8 = arith.truncf %7 : vector<128x128xf32> to vector<128x128xbf16>
    %c1 = arith.constant 1 : index
    %c0_7 = arith.constant 0 : index
    %c0_8 = arith.constant 0 : index
    %9 = vector.load %arg2[%c1, %c0_7, %c0_8] : memref<3x128x128xbf16, #tpu.memory_space<vmem>>, vector<1x128x128xbf16>
    %10 = vector.shape_cast %9 : vector<1x128x128xbf16> to vector<128x128xbf16>
    %cst_9 = arith.constant dense<0.000000e+00> : vector<128x128xf32>
    %11 = tpu.matmul %8, %10, %cst_9 {dimension_numbers = #tpu.dot_dimension_numbers<[1], [0], [0], [1], [0, 0, 1, 1], [], []>} : vector<128x128xbf16>, vector<128x128xbf16>, vector<128x128xf32> -> vector<128x128xf32>
    %12 = arith.addf %4, %11 : vector<128x128xf32>
    %c0_10 = arith.constant 0 : index
    %c0_11 = arith.constant 0 : index
    %13 = vector.load %arg0[%c0_10, %c0_11] : memref<128x128xbf16, #tpu.memory_space<vmem>>, vector<128x128xbf16>
    %14 = arith.truncf %7 : vector<128x128xf32> to vector<128x128xbf16>
    %cst_12 = arith.constant dense<0.000000e+00> : vector<128x128xf32>
    %15 = tpu.matmul %13, %14, %cst_12 {dimension_numbers = #tpu.dot_dimension_numbers<[1], [0], [0], [1], [0, 0, 1, 1], [], []>} : vector<128x128xbf16>, vector<128x128xbf16>, vector<128x128xf32> -> vector<128x128xf32>
    %cst_13 = arith.constant 2.000000e+00 : f32
    %16 = vector.broadcast %cst_13 : f32 to vector<128x128xf32>
    %17 = arith.mulf %16, %15 : vector<128x128xf32>
    %18 = arith.subf %17, %0 : vector<128x128xf32>
    %19 = arith.truncf %18 : vector<128x128xf32> to vector<128x128xbf16>
    %c2 = arith.constant 2 : index
    %c0_14 = arith.constant 0 : index
    %c0_15 = arith.constant 0 : index
    %20 = vector.load %arg2[%c2, %c0_14, %c0_15] : memref<3x128x128xbf16, #tpu.memory_space<vmem>>, vector<1x128x128xbf16>
    %21 = vector.shape_cast %20 : vector<1x128x128xbf16> to vector<128x128xbf16>
    %cst_16 = arith.constant dense<0.000000e+00> : vector<128x128xf32>
    %22 = tpu.matmul %19, %21, %cst_16 {dimension_numbers = #tpu.dot_dimension_numbers<[1], [0], [0], [1], [0, 0, 1, 1], [], []>} : vector<128x128xbf16>, vector<128x128xbf16>, vector<128x128xf32> -> vector<128x128xf32>
    %23 = arith.addf %12, %22 : vector<128x128xf32>
    %c0_17 = arith.constant 0 : index
    %c0_18 = arith.constant 0 : index
    %24 = vector.load %arg3[%c0_17, %c0_18] : memref<1x128xf32, #tpu.memory_space<vmem>>, vector<1x128xf32>
    %25 = vector.broadcast %24 : vector<1x128xf32> to vector<128x128xf32>
    %26 = arith.addf %23, %25 : vector<128x128xf32>
    %cst_19 = arith.constant 0.000000e+00 : f32
    %27 = vector.broadcast %cst_19 : f32 to vector<128x128xf32>
    %28 = arith.maximumf %26, %27 : vector<128x128xf32>
    %29 = arith.truncf %28 : vector<128x128xf32> to vector<128x128xbf16>
    %c0_20 = arith.constant 0 : index
    %c0_21 = arith.constant 0 : index
    %c0_22 = arith.constant 0 : index
    %30 = vector.load %arg4[%c0_20, %c0_21, %c0_22] : memref<3x128x128xbf16, #tpu.memory_space<vmem>>, vector<1x128x128xbf16>
    %31 = vector.shape_cast %30 : vector<1x128x128xbf16> to vector<128x128xbf16>
    %cst_23 = arith.constant dense<0.000000e+00> : vector<128x128xf32>
    %32 = tpu.matmul %29, %31, %cst_23 {dimension_numbers = #tpu.dot_dimension_numbers<[1], [0], [0], [1], [0, 0, 1, 1], [], []>} : vector<128x128xbf16>, vector<128x128xbf16>, vector<128x128xf32> -> vector<128x128xf32>
    %c0_24 = arith.constant 0 : index
    %c0_25 = arith.constant 0 : index
    %33 = vector.load %arg0[%c0_24, %c0_25] : memref<128x128xbf16, #tpu.memory_space<vmem>>, vector<128x128xbf16>
    %34 = arith.truncf %28 : vector<128x128xf32> to vector<128x128xbf16>
    %cst_26 = arith.constant dense<0.000000e+00> : vector<128x128xf32>
    %35 = tpu.matmul %33, %34, %cst_26 {dimension_numbers = #tpu.dot_dimension_numbers<[1], [0], [0], [1], [0, 0, 1, 1], [], []>} : vector<128x128xbf16>, vector<128x128xbf16>, vector<128x128xf32> -> vector<128x128xf32>
    %36 = arith.truncf %35 : vector<128x128xf32> to vector<128x128xbf16>
    %c1_27 = arith.constant 1 : index
    %c0_28 = arith.constant 0 : index
    %c0_29 = arith.constant 0 : index
    %37 = vector.load %arg4[%c1_27, %c0_28, %c0_29] : memref<3x128x128xbf16, #tpu.memory_space<vmem>>, vector<1x128x128xbf16>
    %38 = vector.shape_cast %37 : vector<1x128x128xbf16> to vector<128x128xbf16>
    %cst_30 = arith.constant dense<0.000000e+00> : vector<128x128xf32>
    %39 = tpu.matmul %36, %38, %cst_30 {dimension_numbers = #tpu.dot_dimension_numbers<[1], [0], [0], [1], [0, 0, 1, 1], [], []>} : vector<128x128xbf16>, vector<128x128xbf16>, vector<128x128xf32> -> vector<128x128xf32>
    %40 = arith.addf %32, %39 : vector<128x128xf32>
    %c0_31 = arith.constant 0 : index
    %c0_32 = arith.constant 0 : index
    %41 = vector.load %arg0[%c0_31, %c0_32] : memref<128x128xbf16, #tpu.memory_space<vmem>>, vector<128x128xbf16>
    %42 = arith.truncf %35 : vector<128x128xf32> to vector<128x128xbf16>
    %cst_33 = arith.constant dense<0.000000e+00> : vector<128x128xf32>
    %43 = tpu.matmul %41, %42, %cst_33 {dimension_numbers = #tpu.dot_dimension_numbers<[1], [0], [0], [1], [0, 0, 1, 1], [], []>} : vector<128x128xbf16>, vector<128x128xbf16>, vector<128x128xf32> -> vector<128x128xf32>
    %cst_34 = arith.constant 2.000000e+00 : f32
    %44 = vector.broadcast %cst_34 : f32 to vector<128x128xf32>
    %45 = arith.mulf %44, %43 : vector<128x128xf32>
    %46 = arith.subf %45, %28 : vector<128x128xf32>
    %47 = arith.truncf %46 : vector<128x128xf32> to vector<128x128xbf16>
    %c2_35 = arith.constant 2 : index
    %c0_36 = arith.constant 0 : index
    %c0_37 = arith.constant 0 : index
    %48 = vector.load %arg4[%c2_35, %c0_36, %c0_37] : memref<3x128x128xbf16, #tpu.memory_space<vmem>>, vector<1x128x128xbf16>
    %49 = vector.shape_cast %48 : vector<1x128x128xbf16> to vector<128x128xbf16>
    %cst_38 = arith.constant dense<0.000000e+00> : vector<128x128xf32>
    %50 = tpu.matmul %47, %49, %cst_38 {dimension_numbers = #tpu.dot_dimension_numbers<[1], [0], [0], [1], [0, 0, 1, 1], [], []>} : vector<128x128xbf16>, vector<128x128xbf16>, vector<128x128xf32> -> vector<128x128xf32>
    %51 = arith.addf %40, %50 : vector<128x128xf32>
    %c0_39 = arith.constant 0 : index
    %c0_40 = arith.constant 0 : index
    %52 = vector.load %arg5[%c0_39, %c0_40] : memref<1x128xf32, #tpu.memory_space<vmem>>, vector<1x128xf32>
    %53 = vector.broadcast %52 : vector<1x128xf32> to vector<128x128xf32>
    %54 = arith.addf %51, %53 : vector<128x128xf32>
    %c0_41 = arith.constant 0 : index
    %c0_42 = arith.constant 0 : index
    %55 = vector.load %arg6[%c0_41, %c0_42] : memref<128x128xf32, #tpu.memory_space<vmem>>, vector<128x128xf32>
    tpu.vector_store %arg6[%c0_41, %c0_42], %54 {strides = array<i32>} : memref<128x128xf32, #tpu.memory_space<vmem>>, vector<128x128xf32>,
    return
  }
}

</mosaic_0001>

<llo_original>
// kernel: tpu_custom_call.1
$region0: #{tpu_custom_call.1}
  #allocation0 [shape = 'u32[]', space=smem, size = 0x4, offset = 0x4, fixed_abs, tag = 'smem constant byte address 0x4 - core index']
  #allocation1 [shape = 'u32[144,128]{1,0:T(1,128)}', space=vmem, size = 0x12000, scoped, tag = 'internal scratch']
  %s0 = inlined_call_operand.hbm [shape: bf16[128,128], index: 0, kind: input, shape index: {}]
  %s1 = inlined_call_operand.hbm [shape: f32[128,128], index: 1, kind: input, shape index: {}]
  %s2 = inlined_call_operand.hbm [shape: bf16[3,128,128], index: 2, kind: input, shape index: {}]
  %s3 = inlined_call_operand.vmem [shape: f32[1,128], index: 3, kind: input, shape index: {}]
  %s4 = inlined_call_operand.hbm [shape: bf16[3,128,128], index: 4, kind: input, shape index: {}]
  %s5 = inlined_call_operand.vmem [shape: f32[1,128], index: 5, kind: input, shape index: {}]
  %s6 = inlined_call_operand.hbm [shape: f32[128,128], index: 6, kind: output, shape index: {}]
  %s7 = sld [smem:[#allocation0]]
  $region50: #{tpu_custom_call.1} parent=0
    _
  %s9 = ssub.s32 1, %s7
  %s10 = scalar_select 0, %s9, %s7
  $region1: #{tpu_custom_call.1} parent=0
    #allocation2 [shape = 'u8[32768]{0}', space=vmem, size = 0x8000, scoped, tag = 'input window, operand 0, single buffered']
    #allocation3 [shape = 's32[1]{0}', space=sflag, size = 0x4, scoped, tag = 'scoped memory for tpu_custom_call.1']
    #allocation4 [shape = 's32[1]{0}', space=sflag, size = 0x4, scoped, tag = 'scoped memory for tpu_custom_call.1']
    #allocation5 [shape = 'u8[65536]{0}', space=vmem, size = 0x10000, scoped, tag = 'input window, operand 1, single buffered']
    #allocation6 [shape = 's32[1]{0}', space=sflag, size = 0x4, scoped, tag = 'scoped memory for tpu_custom_call.1']
    #allocation7 [shape = 'u8[98304]{0}', space=vmem, size = 0x18000, scoped, tag = 'input window, operand 2, single buffered']
    #allocation8 [shape = 'u8[98304]{0}', space=vmem, size = 0x18000, scoped, tag = 'input window, operand 4, single buffered']
    #allocation9 [shape = 's32[1]{0}', space=sflag, size = 0x4, scoped, tag = 'scoped memory for tpu_custom_call.1']
    #allocation10 [shape = 'u8[65536]{0}', space=vmem, size = 0x10000, scoped, tag = 'output window, operand 0, single buffered']
    %11 = vsyncpa [#allocation3], 0
    %12 = vsyncpa [#allocation6], 0
    %13 = vsyncpa [#allocation9], 0
    %14 = vsyncpa [#allocation4], 0
    // Predicated region
    $region2: #{tpu_custom_call.1} parent=1 // pred_check
      _
    $region3: #{tpu_custom_call.1} parent=1 // pred_check_branch
      %16 = sbr.rel (0) target = $region5
    $region4: #{tpu_custom_call.1} parent=1 // pred_region
      %s18 = ssub.s32 1024, 1024
      %19 = vsyncadd [#allocation3], %s18
      %s20 = sshll.u32 [#allocation2], 4
      %s21 = int_to_ptr.vmem [resolvable:$true] %s20
      %26 = dma.hbm_to_vmem [thread:$0]  %s0, 1024, %s21, [#allocation3], 64, 64, 4
    $region5: #{tpu_custom_call.1} parent=1 // pred_fallthru
      _
    // Predicated region
    $region6: #{tpu_custom_call.1} parent=1 // pred_check
      _
    $region7: #{tpu_custom_call.1} parent=1 // pred_check_branch
      %28 = sbr.rel (0) target = $region9
    $region8: #{tpu_custom_call.1} parent=1 // pred_region
      %s30 = ssub.s32 2048, 2048
      %31 = vsyncadd [#allocation6], %s30
      %s32 = sshll.u32 [#allocation5], 4
      %s33 = int_to_ptr.vmem [resolvable:$true] %s32
      %38 = dma.hbm_to_vmem [thread:$0]  %s1, 2048, %s33, [#allocation6], 128, 128, 8
    $region9: #{tpu_custom_call.1} parent=1 // pred_fallthru
      _
    // Predicated region
    $region10: #{tpu_custom_call.1} parent=1 // pred_check
      _
    $region11: #{tpu_custom_call.1} parent=1 // pred_check_branch
      %40 = sbr.rel (0) target = $region13
    $region12: #{tpu_custom_call.1} parent=1 // pred_region
      %s42 = ssub.s32 3072, 3072
      %43 = vsyncadd [#allocation6], %s42
      %s44 = sshll.u32 [#allocation7], 4
      %s45 = int_to_ptr.vmem [resolvable:$true] %s44
      %50 = dma.hbm_to_vmem [thread:$0]  %s2, 3072, %s45, [#allocation6], 64, 64, 4
    $region13: #{tpu_custom_call.1} parent=1 // pred_fallthru
      _
    // Predicated region
    $region14: #{tpu_custom_call.1} parent=1 // pred_check
      _
    $region15: #{tpu_custom_call.1} parent=1 // pred_check_branch
      %52 = sbr.rel (0) target = $region17
    $region16: #{tpu_custom_call.1} parent=1 // pred_region
      _
    $region17: #{tpu_custom_call.1} parent=1 // pred_fallthru
      _
    // Predicated region
    $region18: #{tpu_custom_call.1} parent=1 // pred_check
      _
    $region19: #{tpu_custom_call.1} parent=1 // pred_check_branch
      %54 = sbr.rel (0) target = $region21
    $region20: #{tpu_custom_call.1} parent=1 // pred_region
      %s56 = ssub.s32 3072, 3072
      %57 = vsyncadd [#allocation9], %s56
      %s58 = sshll.u32 [#allocation8], 4
      %s59 = int_to_ptr.vmem [resolvable:$true] %s58
      %64 = dma.hbm_to_vmem [thread:$0]  %s4, 3072, %s59, [#allocation9], 64, 64, 4
    $region21: #{tpu_custom_call.1} parent=1 // pred_fallthru
      _
    // Predicated region
    $region22: #{tpu_custom_call.1} parent=1 // pred_check
      _
    $region23: #{tpu_custom_call.1} parent=1 // pred_check_branch
      %66 = sbr.rel (0) target = $region25
    $region24: #{tpu_custom_call.1} parent=1 // pred_region
      _
    $region25: #{tpu_custom_call.1} parent=1 // pred_fallthru
      _
    // Predicated region
    $region26: #{tpu_custom_call.1} parent=1 // pred_check
      _
    $region27: #{tpu_custom_call.1} parent=1 // pred_check_branch
      %68 = sbr.rel (0) target = $region29
    $region28: #{tpu_custom_call.1} parent=1 // pred_region
      %69 = dma.done [#allocation3], 1024
    $region29: #{tpu_custom_call.1} parent=1 // pred_fallthru
      _
    // Predicated region
    $region30: #{tpu_custom_call.1} parent=1 // pred_check
      _
    $region31: #{tpu_custom_call.1} parent=1 // pred_check_branch
      %71 = sbr.rel (0) target = $region33
    $region32: #{tpu_custom_call.1} parent=1 // pred_region
      %72 = dma.done [#allocation6], 2048
    $region33: #{tpu_custom_call.1} parent=1 // pred_fallthru
      _
    // Predicated region
    $region34: #{tpu_custom_call.1} parent=1 // pred_check
      _
    $region35: #{tpu_custom_call.1} parent=1 // pred_check_branch
      %74 = sbr.rel (0) target = $region37
    $region36: #{tpu_custom_call.1} parent=1 // pred_region
      %75 = dma.done [#allocation6], 3072
    $region37: #{tpu_custom_call.1} parent=1 // pred_fallthru
      _
    // Predicated region
    $region38: #{tpu_custom_call.1} parent=1 // pred_check
      _
    $region39: #{tpu_custom_call.1} parent=1 // pred_check_branch
      %77 = sbr.rel (0) target = $region41
    $region40: #{tpu_custom_call.1} parent=1 // pred_region
      %78 = dma.done [#allocation9], 3072
    $region41: #{tpu_custom_call.1} parent=1 // pred_fallthru
      _
    %v80 = vld [vmem:[#allocation5] sm:$0xff]
    %v81 = vld [vmem:[#allocation5 + $0x8] sm:$0xff]
    %v82 = vld [vmem:[#allocation5 + $0x10] sm:$0xff]
    %v83 = vld [vmem:[#allocation5 + $0x18] sm:$0xff]
    %v84 = vld [vmem:[#allocation5 + $0x20] sm:$0xff]
    %v85 = vld [vmem:[#allocation5 + $0x28] sm:$0xff]
    %v86 = vld [vmem:[#allocation5 + $0x30] sm:$0xff]
    %v87 = vld [vmem:[#allocation5 + $0x38] sm:$0xff]
    %v88 = vld [vmem:[#allocation5 + $0x40] sm:$0xff]
    %v89 = vld [vmem:[#allocation5 + $0x48] sm:$0xff]
    %v90 = vld [vmem:[#allocation5 + $0x50] sm:$0xff]
    %v91 = vld [vmem:[#allocation5 + $0x58] sm:$0xff]
    %v92 = vld [vmem:[#allocation5 + $0x60] sm:$0xff]
    %v93 = vld [vmem:[#allocation5 + $0x68] sm:$0xff]
    %v94 = vld [vmem:[#allocation5 + $0x70] sm:$0xff]
    %v95 = vld [vmem:[#allocation5 + $0x78] sm:$0xff]
    %v96 = vpack.c.bf16 %v81, %v80
    %v97 = vpack.c.bf16 %v83, %v82
    %v98 = vpack.c.bf16 %v85, %v84
    %v99 = vpack.c.bf16 %v87, %v86
    %v100 = vpack.c.bf16 %v89, %v88
    %v101 = vpack.c.bf16 %v91, %v90
    %v102 = vpack.c.bf16 %v93, %v92
    %v103 = vpack.c.bf16 %v95, %v94
    %v104 = vld [vmem:[#allocation7] sm:$0xf]
    %v105 = vld [vmem:[#allocation7 + $0x4] sm:$0xf]
    %v106 = vld [vmem:[#allocation7 + $0x8] sm:$0xf]
    %v107 = vld [vmem:[#allocation7 + $0xc] sm:$0xf]
    %v108 = vld [vmem:[#allocation7 + $0x10] sm:$0xf]
    %v109 = vld [vmem:[#allocation7 + $0x14] sm:$0xf]
    %v110 = vld [vmem:[#allocation7 + $0x18] sm:$0xf]
    %v111 = vld [vmem:[#allocation7 + $0x1c] sm:$0xf]
    %v112 = vld [vmem:[#allocation7 + $0x20] sm:$0xf]
    %v113 = vld [vmem:[#allocation7 + $0x24] sm:$0xf]
    %v114 = vld [vmem:[#allocation7 + $0x28] sm:$0xf]
    %v115 = vld [vmem:[#allocation7 + $0x2c] sm:$0xf]
    %v116 = vld [vmem:[#allocation7 + $0x30] sm:$0xf]
    %v117 = vld [vmem:[#allocation7 + $0x34] sm:$0xf]
    %v118 = vld [vmem:[#allocation7 + $0x38] sm:$0xf]
    %v119 = vld [vmem:[#allocation7 + $0x3c] sm:$0xf]
    %v120 = vld [vmem:[#allocation2] sm:$0xf]
    %v121 = vld [vmem:[#allocation2 + $0x4] sm:$0xf]
    %v122 = vld [vmem:[#allocation2 + $0x8] sm:$0xf]
    %v123 = vld [vmem:[#allocation2 + $0xc] sm:$0xf]
    %v124 = vld [vmem:[#allocation2 + $0x10] sm:$0xf]
    %v125 = vld [vmem:[#allocation2 + $0x14] sm:$0xf]
    %v126 = vld [vmem:[#allocation2 + $0x18] sm:$0xf]
    %v127 = vld [vmem:[#allocation2 + $0x1c] sm:$0xf]
    %v128 = vld [vmem:[#allocation2 + $0x20] sm:$0xf]
    %v129 = vld [vmem:[#allocation2 + $0x24] sm:$0xf]
    %v130 = vld [vmem:[#allocation2 + $0x28] sm:$0xf]
    %v131 = vld [vmem:[#allocation2 + $0x2c] sm:$0xf]
    %v132 = vld [vmem:[#allocation2 + $0x30] sm:$0xf]
    %v133 = vld [vmem:[#allocation2 + $0x34] sm:$0xf]
    %v134 = vld [vmem:[#allocation2 + $0x38] sm:$0xf]
    %v135 = vld [vmem:[#allocation2 + $0x3c] sm:$0xf]
    %v152 = vunpack.c.l.b16 %v120
    %v153 = vunpack.c.l.b16 %v121
    %v154 = vunpack.c.l.b16 %v122
    %v155 = vunpack.c.l.b16 %v123
    %v156 = vunpack.c.l.b16 %v124
    %v157 = vunpack.c.l.b16 %v125
    %v158 = vunpack.c.l.b16 %v126
    %v159 = vunpack.c.l.b16 %v127
    %v160 = vunpack.c.l.b16 %v128
    %v161 = vunpack.c.l.b16 %v129
    %v162 = vunpack.c.l.b16 %v130
    %v163 = vunpack.c.l.b16 %v131
    %v164 = vunpack.c.l.b16 %v132
    %v165 = vunpack.c.l.b16 %v133
    %v166 = vunpack.c.l.b16 %v134
    %v167 = vunpack.c.l.b16 %v135
    %v168 = vpack.c.b16 %v153, %v152
    %v169 = vpack.c.b16 %v155, %v154
    %v170 = vpack.c.b16 %v157, %v156
    %v171 = vpack.c.b16 %v159, %v158
    %v172 = vpack.c.b16 %v161, %v160
    %v173 = vpack.c.b16 %v163, %v162
    %v174 = vpack.c.b16 %v165, %v164
    %v175 = vpack.c.b16 %v167, %v166
    %184 = vmatprep.subr.bf16.mxu0 0
    %185 = vmatpush1.bf16.msra.mxu0 %v96
    %186 = vmatprep.subr.bf16.mxu0 0
    %187 = vmatpush1.bf16.msra.mxu0 %v97
    %188 = vmatprep.subr.bf16.mxu0 0
    %189 = vmatpush1.bf16.msra.mxu0 %v98
    %190 = vmatprep.subr.bf16.mxu0 0
    %191 = vmatpush1.bf16.msra.mxu0 %v99
    %192 = vmatprep.subr.bf16.mxu0 0
    %193 = vmatpush1.bf16.msra.mxu0 %v100
    %194 = vmatprep.subr.bf16.mxu0 0
    %195 = vmatpush1.bf16.msra.mxu0 %v101
    %196 = vmatprep.subr.bf16.mxu0 0
    %197 = vmatpush1.bf16.msra.mxu0 %v102
    %198 = vmatprep.subr.bf16.mxu0 0
    %199 = vmatpush1.bf16.msra.mxu0 %v103
    %200 = vmatprep.subr.bf16.mxu0 0
    %201 = vmatpush1.bf16.msra.mxu0 0
    %202 = vmatprep.subr.bf16.mxu0 0
    %203 = vmatpush1.bf16.msra.mxu0 0
    %204 = vmatprep.subr.bf16.mxu0 0
    %205 = vmatpush1.bf16.msra.mxu0 0
    %206 = vmatprep.subr.bf16.mxu0 0
    %207 = vmatpush1.bf16.msra.mxu0 0
    %208 = vmatprep.subr.bf16.mxu0 0
    %209 = vmatpush1.bf16.msra.mxu0 0
    %210 = vmatprep.subr.bf16.mxu0 0
    %211 = vmatpush1.bf16.msra.mxu0 0
    %212 = vmatprep.subr.bf16.mxu0 0
    %213 = vmatpush1.bf16.msra.mxu0 0
    %214 = vmatprep.subr.bf16.mxu0 0
    %215 = vmatpush1.bf16.msra.mxu0 0
    %216 = vmatprep.mubr.bf16.mxu0 0
    %217 = vmatmul.mubr.bf16.gmra.mrb[0].mxu0 %v168
    %v218 = vpop.f32.mrb[0].mxu0
    %v219 = vadd.f32 0.0, %v218
    %v220 = vpop.f32.mrb[0].mxu0
    %v221 = vpop.f32.mrb[0].mxu0
    %v222 = vadd.f32 0.0, %v221
    %v223 = vpop.f32.mrb[0].mxu0
    %224 = vmatprep.mubr.bf16.mxu0 0
    %225 = vmatmul.mubr.bf16.gmra.mrb[0].mxu0 %v169
    %v226 = vpop.f32.mrb[0].mxu0
    %v227 = vadd.f32 0.0, %v226
    %v228 = vpop.f32.mrb[0].mxu0
    %v229 = vpop.f32.mrb[0].mxu0
    %v230 = vadd.f32 0.0, %v229
    %v231 = vpop.f32.mrb[0].mxu0
    %232 = vmatprep.mubr.bf16.mxu0 0
    %233 = vmatmul.mubr.bf16.gmra.mrb[0].mxu0 %v170
    %v234 = vpop.f32.mrb[0].mxu0
    %v235 = vadd.f32 0.0, %v234
    %v236 = vpop.f32.mrb[0].mxu0
    %v237 = vpop.f32.mrb[0].mxu0
    %v238 = vadd.f32 0.0, %v237
    %v239 = vpop.f32.mrb[0].mxu0
    %240 = vmatprep.mubr.bf16.mxu0 0
    %241 = vmatmul.mubr.bf16.gmra.mrb[0].mxu0 %v171
    %v242 = vpop.f32.mrb[0].mxu0
    %v243 = vadd.f32 0.0, %v242
    %v244 = vpop.f32.mrb[0].mxu0
    %v245 = vpop.f32.mrb[0].mxu0
    %v246 = vadd.f32 0.0, %v245
    %v247 = vpop.f32.mrb[0].mxu0
    %248 = vmatprep.mubr.bf16.mxu0 0
    %249 = vmatmul.mubr.bf16.gmra.mrb[0].mxu0 %v172
    %v250 = vpop.f32.mrb[0].mxu0
    %v251 = vadd.f32 0.0, %v250
    %v252 = vpop.f32.mrb[0].mxu0
    %v253 = vpop.f32.mrb[0].mxu0
    %v254 = vadd.f32 0.0, %v253
    %v255 = vpop.f32.mrb[0].mxu0
    %256 = vmatprep.mubr.bf16.mxu0 0
    %257 = vmatmul.mubr.bf16.gmra.mrb[0].mxu0 %v173
    %v258 = vpop.f32.mrb[0].mxu0
    %v259 = vadd.f32 0.0, %v258
    %v260 = vpop.f32.mrb[0].mxu0
    %v261 = vpop.f32.mrb[0].mxu0
    %v262 = vadd.f32 0.0, %v261
    %v263 = vpop.f32.mrb[0].mxu0
    %264 = vmatprep.mubr.bf16.mxu0 0
    %265 = vmatmul.mubr.bf16.gmra.mrb[0].mxu0 %v174
    %v266 = vpop.f32.mrb[0].mxu0
    %v267 = vadd.f32 0.0, %v266
    %v268 = vpop.f32.mrb[0].mxu0
    %v269 = vpop.f32.mrb[0].mxu0
    %v270 = vadd.f32 0.0, %v269
    %v271 = vpop.f32.mrb[0].mxu0
    %272 = vmatprep.mubr.bf16.mxu0 0
    %273 = vmatmul.mubr.bf16.gmra.mrb[0].mxu0 %v175
    %v274 = vpop.f32.mrb[0].mxu0
    %v275 = vadd.f32 0.0, %v274
    %v276 = vpop.f32.mrb[0].mxu0
    %v277 = vpop.f32.mrb[0].mxu0
    %v278 = vadd.f32 0.0, %v277
    %v279 = vpop.f32.mrb[0].mxu0
    %280 = vdwg.mxu0
    %v281 = vpack.c.bf16 %v222, %v219
    %v282 = vpack.c.bf16 %v230, %v227
    %v283 = vpack.c.bf16 %v238, %v235
    %v284 = vpack.c.bf16 %v246, %v243
    %v285 = vpack.c.bf16 %v254, %v251
    %v286 = vpack.c.bf16 %v262, %v259
    %v287 = vpack.c.bf16 %v270, %v267
    %v288 = vpack.c.bf16 %v278, %v275
    %s289 = scalar_lea.vmem [#allocation7], 64
    %v290 = vld [vmem:[%s289] sm:$0xf]
    %v291 = vld [vmem:[%s289 + $0x4] sm:$0xf]
    %v292 = vld [vmem:[%s289 + $0x8] sm:$0xf]
    %v293 = vld [vmem:[%s289 + $0xc] sm:$0xf]
    %v294 = vld [vmem:[%s289 + $0x10] sm:$0xf]
    %v295 = vld [vmem:[%s289 + $0x14] sm:$0xf]
    %v296 = vld [vmem:[%s289 + $0x18] sm:$0xf]
    %v297 = vld [vmem:[%s289 + $0x1c] sm:$0xf]
    %v298 = vld [vmem:[%s289 + $0x20] sm:$0xf]
    %v299 = vld [vmem:[%s289 + $0x24] sm:$0xf]
    %v300 = vld [vmem:[%s289 + $0x28] sm:$0xf]
    %v301 = vld [vmem:[%s289 + $0x2c] sm:$0xf]
    %v302 = vld [vmem:[%s289 + $0x30] sm:$0xf]
    %v303 = vld [vmem:[%s289 + $0x34] sm:$0xf]
    %v304 = vld [vmem:[%s289 + $0x38] sm:$0xf]
    %v305 = vld [vmem:[%s289 + $0x3c] sm:$0xf]
    %v322 = vunpack.c.l.b16 %v290
    %v323 = vunpack.c.l.b16 %v291
    %v324 = vunpack.c.l.b16 %v292
    %v325 = vunpack.c.l.b16 %v293
    %v326 = vunpack.c.l.b16 %v294
    %v327 = vunpack.c.l.b16 %v295
    %v328 = vunpack.c.l.b16 %v296
    %v329 = vunpack.c.l.b16 %v297
    %v330 = vunpack.c.l.b16 %v298
    %v331 = vunpack.c.l.b16 %v299
    %v332 = vunpack.c.l.b16 %v300
    %v333 = vunpack.c.l.b16 %v301
    %v334 = vunpack.c.l.b16 %v302
    %v335 = vunpack.c.l.b16 %v303
    %v336 = vunpack.c.l.b16 %v304
    %v337 = vunpack.c.l.b16 %v305
    %v338 = vpack.c.b16 %v323, %v322
    %v339 = vpack.c.b16 %v325, %v324
    %v340 = vpack.c.b16 %v327, %v326
    %v341 = vpack.c.b16 %v329, %v328
    %v342 = vpack.c.b16 %v331, %v330
    %v343 = vpack.c.b16 %v333, %v332
    %v344 = vpack.c.b16 %v335, %v334
    %v345 = vpack.c.b16 %v337, %v336
    %354 = vmatprep.subr.bf16.mxu0 0
    %355 = vmatpush1.bf16.msra.mxu0 %v338
    %356 = vmatprep.subr.bf16.mxu0 0
    %357 = vmatpush1.bf16.msra.mxu0 %v339
    %358 = vmatprep.subr.bf16.mxu0 0
    %359 = vmatpush1.bf16.msra.mxu0 %v340
    %360 = vmatprep.subr.bf16.mxu0 0
    %361 = vmatpush1.bf16.msra.mxu0 %v341
    %362 = vmatprep.subr.bf16.mxu0 0
    %363 = vmatpush1.bf16.msra.mxu0 %v342
    %364 = vmatprep.subr.bf16.mxu0 0
    %365 = vmatpush1.bf16.msra.mxu0 %v343
    %366 = vmatprep.subr.bf16.mxu0 0
    %367 = vmatpush1.bf16.msra.mxu0 %v344
    %368 = vmatprep.subr.bf16.mxu0 0
    %369 = vmatpush1.bf16.msra.mxu0 %v345
    %370 = vmatprep.subr.bf16.mxu0 0
    %371 = vmatpush1.bf16.msra.mxu0 0
    %372 = vmatprep.subr.bf16.mxu0 0
    %373 = vmatpush1.bf16.msra.mxu0 0
    %374 = vmatprep.subr.bf16.mxu0 0
    %375 = vmatpush1.bf16.msra.mxu0 0
    %376 = vmatprep.subr.bf16.mxu0 0
    %377 = vmatpush1.bf16.msra.mxu0 0
    %378 = vmatprep.subr.bf16.mxu0 0
    %379 = vmatpush1.bf16.msra.mxu0 0
    %380 = vmatprep.subr.bf16.mxu0 0
    %381 = vmatpush1.bf16.msra.mxu0 0
    %382 = vmatprep.subr.bf16.mxu0 0
    %383 = vmatpush1.bf16.msra.mxu0 0
    %384 = vmatprep.subr.bf16.mxu0 0
    %385 = vmatpush1.bf16.msra.mxu0 0
    %386 = vmatprep.mubr.bf16.mxu0 0
    %387 = vmatmul.mubr.bf16.gmra.mrb[0].mxu0 %v281
    %v388 = vpop.f32.mrb[0].mxu0
    %v389 = vadd.f32 0.0, %v388
    %v390 = vpop.f32.mrb[0].mxu0
    %v391 = vpop.f32.mrb[0].mxu0
    %v392 = vadd.f32 0.0, %v391
    %v393 = vpop.f32.mrb[0].mxu0
    %394 = vmatprep.mubr.bf16.mxu0 0
    %395 = vmatmul.mubr.bf16.gmra.mrb[0].mxu0 %v282
    %v396 = vpop.f32.mrb[0].mxu0
    %v397 = vadd.f32 0.0, %v396
    %v398 = vpop.f32.mrb[0].mxu0
    %v399 = vpop.f32.mrb[0].mxu0
    %v400 = vadd.f32 0.0, %v399
    %v401 = vpop.f32.mrb[0].mxu0
    %402 = vmatprep.mubr.bf16.mxu0 0
    %403 = vmatmul.mubr.bf16.gmra.mrb[0].mxu0 %v283
    %v404 = vpop.f32.mrb[0].mxu0
    %v405 = vadd.f32 0.0, %v404
    %v406 = vpop.f32.mrb[0].mxu0
    %v407 = vpop.f32.mrb[0].mxu0
    %v408 = vadd.f32 0.0, %v407
    %v409 = vpop.f32.mrb[0].mxu0
    %410 = vmatprep.mubr.bf16.mxu0 0
    %411 = vmatmul.mubr.bf16.gmra.mrb[0].mxu0 %v284
    %v412 = vpop.f32.mrb[0].mxu0
    %v413 = vadd.f32 0.0, %v412
    %v414 = vpop.f32.mrb[0].mxu0
    %v415 = vpop.f32.mrb[0].mxu0
    %v416 = vadd.f32 0.0, %v415
    %v417 = vpop.f32.mrb[0].mxu0
    %418 = vmatprep.mubr.bf16.mxu0 0
    %419 = vmatmul.mubr.bf16.gmra.mrb[0].mxu0 %v285
    %v420 = vpop.f32.mrb[0].mxu0
    %v421 = vadd.f32 0.0, %v420
    %v422 = vpop.f32.mrb[0].mxu0
    %v423 = vpop.f32.mrb[0].mxu0
    %v424 = vadd.f32 0.0, %v423
    %v425 = vpop.f32.mrb[0].mxu0
    %426 = vmatprep.mubr.bf16.mxu0 0
    %427 = vmatmul.mubr.bf16.gmra.mrb[0].mxu0 %v286
    %v428 = vpop.f32.mrb[0].mxu0
    %v429 = vadd.f32 0.0, %v428
    %v430 = vpop.f32.mrb[0].mxu0
    %v431 = vpop.f32.mrb[0].mxu0
    %v432 = vadd.f32 0.0, %v431
    %v433 = vpop.f32.mrb[0].mxu0
    %434 = vmatprep.mubr.bf16.mxu0 0
    %435 = vmatmul.mubr.bf16.gmra.mrb[0].mxu0 %v287
    %v436 = vpop.f32.mrb[0].mxu0
    %v437 = vadd.f32 0.0, %v436
    %v438 = vpop.f32.mrb[0].mxu0
    %v439 = vpop.f32.mrb[0].mxu0
    %v440 = vadd.f32 0.0, %v439
    %v441 = vpop.f32.mrb[0].mxu0
    %442 = vmatprep.mubr.bf16.mxu0 0
    %443 = vmatmul.mubr.bf16.gmra.mrb[0].mxu0 %v288
    %v444 = vpop.f32.mrb[0].mxu0
    %v445 = vadd.f32 0.0, %v444
    %v446 = vpop.f32.mrb[0].mxu0
    %v447 = vpop.f32.mrb[0].mxu0
    %v448 = vadd.f32 0.0, %v447
    %v449 = vpop.f32.mrb[0].mxu0
    %450 = vdwg.mxu0
    %v467 = vunpack.c.l.b16 %v104
    %v468 = vunpack.c.l.b16 %v105
    %v469 = vunpack.c.l.b16 %v106
    %v470 = vunpack.c.l.b16 %v107
    %v471 = vunpack.c.l.b16 %v108
    %v472 = vunpack.c.l.b16 %v109
    %v473 = vunpack.c.l.b16 %v110
    %v474 = vunpack.c.l.b16 %v111
    %v475 = vunpack.c.l.b16 %v112
    %v476 = vunpack.c.l.b16 %v113
    %v477 = vunpack.c.l.b16 %v114
    %v478 = vunpack.c.l.b16 %v115
    %v479 = vunpack.c.l.b16 %v116
    %v480 = vunpack.c.l.b16 %v117
    %v481 = vunpack.c.l.b16 %v118
    %v482 = vunpack.c.l.b16 %v119
    %v483 = vpack.c.b16 %v468, %v467
    %v484 = vpack.c.b16 %v470, %v469
    %v485 = vpack.c.b16 %v472, %v471
    %v486 = vpack.c.b16 %v474, %v473
    %v487 = vpack.c.b16 %v476, %v475
    %v488 = vpack.c.b16 %v478, %v477
    %v489 = vpack.c.b16 %v480, %v479
    %v490 = vpack.c.b16 %v482, %v481
    %499 = vmatprep.subr.bf16.mxu0 0
    %500 = vmatpush1.bf16.msra.mxu0 %v483
    %501 = vmatprep.subr.bf16.mxu0 0
    %502 = vmatpush1.bf16.msra.mxu0 %v484
    %503 = vmatprep.subr.bf16.mxu0 0
    %504 = vmatpush1.bf16.msra.mxu0 %v485
    %505 = vmatprep.subr.bf16.mxu0 0
    %506 = vmatpush1.bf16.msra.mxu0 %v486
    %507 = vmatprep.subr.bf16.mxu0 0
    %508 = vmatpush1.bf16.msra.mxu0 %v487
    %509 = vmatprep.subr.bf16.mxu0 0
    %510 = vmatpush1.bf16.msra.mxu0 %v488
    %511 = vmatprep.subr.bf16.mxu0 0
    %512 = vmatpush1.bf16.msra.mxu0 %v489
    %513 = vmatprep.subr.bf16.mxu0 0
    %514 = vmatpush1.bf16.msra.mxu0 %v490
    %515 = vmatprep.subr.bf16.mxu0 0
    %516 = vmatpush1.bf16.msra.mxu0 0
    %517 = vmatprep.subr.bf16.mxu0 0
    %518 = vmatpush1.bf16.msra.mxu0 0
    %519 = vmatprep.subr.bf16.mxu0 0
    %520 = vmatpush1.bf16.msra.mxu0 0
    %521 = vmatprep.subr.bf16.mxu0 0
    %522 = vmatpush1.bf16.msra.mxu0 0
    %523 = vmatprep.subr.bf16.mxu0 0
    %524 = vmatpush1.bf16.msra.mxu0 0
    %525 = vmatprep.subr.bf16.mxu0 0
    %526 = vmatpush1.bf16.msra.mxu0 0
    %527 = vmatprep.subr.bf16.mxu0 0
    %528 = vmatpush1.bf16.msra.mxu0 0
    %529 = vmatprep.subr.bf16.mxu0 0
    %530 = vmatpush1.bf16.msra.mxu0 0
    %531 = vmatprep.mubr.bf16.mxu0 0
    %532 = vmatmul.mubr.bf16.gmra.mrb[0].mxu0 %v96
    %v533 = vpop.f32.mrb[0].mxu0
    %v534 = vadd.f32 %v389, %v533
    %v535 = vpop.f32.mrb[0].mxu0
    %v536 = vpop.f32.mrb[0].mxu0
    %v537 = vadd.f32 %v392, %v536
    %v538 = vpop.f32.mrb[0].mxu0
    %539 = vmatprep.mubr.bf16.mxu0 0
    %540 = vmatmul.mubr.bf16.gmra.mrb[0].mxu0 %v97
    %v541 = vpop.f32.mrb[0].mxu0
    %v542 = vadd.f32 %v397, %v541
    %v543 = vpop.f32.mrb[0].mxu0
    %v544 = vpop.f32.mrb[0].mxu0
    %v545 = vadd.f32 %v400, %v544
    %v546 = vpop.f32.mrb[0].mxu0
    %547 = vmatprep.mubr.bf16.mxu0 0
    %548 = vmatmul.mubr.bf16.gmra.mrb[0].mxu0 %v98
    %v549 = vpop.f32.mrb[0].mxu0
    %v550 = vadd.f32 %v405, %v549
    %v551 = vpop.f32.mrb[0].mxu0
    %v552 = vpop.f32.mrb[0].mxu0
    %v553 = vadd.f32 %v408, %v552
    %v554 = vpop.f32.mrb[0].mxu0
    %555 = vmatprep.mubr.bf16.mxu0 0
    %556 = vmatmul.mubr.bf16.gmra.mrb[0].mxu0 %v99
    %v557 = vpop.f32.mrb[0].mxu0
    %v558 = vadd.f32 %v413, %v557
    %v559 = vpop.f32.mrb[0].mxu0
    %v560 = vpop.f32.mrb[0].mxu0
    %v561 = vadd.f32 %v416, %v560
    %v562 = vpop.f32.mrb[0].mxu0
    %563 = vmatprep.mubr.bf16.mxu0 0
    %564 = vmatmul.mubr.bf16.gmra.mrb[0].mxu0 %v100
    %v565 = vpop.f32.mrb[0].mxu0
    %v566 = vadd.f32 %v421, %v565
    %v567 = vpop.f32.mrb[0].mxu0
    %v568 = vpop.f32.mrb[0].mxu0
    %v569 = vadd.f32 %v424, %v568
    %v570 = vpop.f32.mrb[0].mxu0
    %571 = vmatprep.mubr.bf16.mxu0 0
    %572 = vmatmul.mubr.bf16.gmra.mrb[0].mxu0 %v101
    %v573 = vpop.f32.mrb[0].mxu0
    %v574 = vadd.f32 %v429, %v573
    %v575 = vpop.f32.mrb[0].mxu0
    %v576 = vpop.f32.mrb[0].mxu0
    %v577 = vadd.f32 %v432, %v576
    %v578 = vpop.f32.mrb[0].mxu0
    %579 = vmatprep.mubr.bf16.mxu0 0
    %580 = vmatmul.mubr.bf16.gmra.mrb[0].mxu0 %v102
    %v581 = vpop.f32.mrb[0].mxu0
    %v582 = vadd.f32 %v437, %v581
    %v583 = vpop.f32.mrb[0].mxu0
    %v584 = vpop.f32.mrb[0].mxu0
    %v585 = vadd.f32 %v440, %v584
    %v586 = vpop.f32.mrb[0].mxu0
    %587 = vmatprep.mubr.bf16.mxu0 0
    %588 = vmatmul.mubr.bf16.gmra.mrb[0].mxu0 %v103
    %v589 = vpop.f32.mrb[0].mxu0
    %v590 = vadd.f32 %v445, %v589
    %v591 = vpop.f32.mrb[0].mxu0
    %v592 = vpop.f32.mrb[0].mxu0
    %v593 = vadd.f32 %v448, %v592
    %v594 = vpop.f32.mrb[0].mxu0
    %595 = vdwg.mxu0
    %596 = vmatprep.subr.bf16.mxu0 0
    %597 = vmatpush1.bf16.msra.mxu0 %v281
    %598 = vmatprep.subr.bf16.mxu0 0
    %599 = vmatpush1.bf16.msra.mxu0 %v282
    %600 = vmatprep.subr.bf16.mxu0 0
    %601 = vmatpush1.bf16.msra.mxu0 %v283
    %602 = vmatprep.subr.bf16.mxu0 0
    %603 = vmatpush1.bf16.msra.mxu0 %v284
    %604 = vmatprep.subr.bf16.mxu0 0
    %605 = vmatpush1.bf16.msra.mxu0 %v285
    %606 = vmatprep.subr.bf16.mxu0 0
    %607 = vmatpush1.bf16.msra.mxu0 %v286
    %608 = vmatprep.subr.bf16.mxu0 0
    %609 = vmatpush1.bf16.msra.mxu0 %v287
    %610 = vmatprep.subr.bf16.mxu0 0
    %611 = vmatpush1.bf16.msra.mxu0 %v288
    %612 = vmatprep.subr.bf16.mxu0 0
    %613 = vmatpush1.bf16.msra.mxu0 0
    %614 = vmatprep.subr.bf16.mxu0 0
    %615 = vmatpush1.bf16.msra.mxu0 0
    %616 = vmatprep.subr.bf16.mxu0 0
    %617 = vmatpush1.bf16.msra.mxu0 0
    %618 = vmatprep.subr.bf16.mxu0 0
    %619 = vmatpush1.bf16.msra.mxu0 0
    %620 = vmatprep.subr.bf16.mxu0 0
    %621 = vmatpush1.bf16.msra.mxu0 0
    %622 = vmatprep.subr.bf16.mxu0 0
    %623 = vmatpush1.bf16.msra.mxu0 0
    %624 = vmatprep.subr.bf16.mxu0 0
    %625 = vmatpush1.bf16.msra.mxu0 0
    %626 = vmatprep.subr.bf16.mxu0 0
    %627 = vmatpush1.bf16.msra.mxu0 0
    %628 = vmatprep.mubr.bf16.mxu0 0
    %629 = vmatmul.mubr.bf16.gmra.mrb[0].mxu0 %v168
    %v630 = vpop.f32.mrb[0].mxu0
    %v631 = vadd.f32 0.0, %v630
    %v632 = vpop.f32.mrb[0].mxu0
    %v633 = vpop.f32.mrb[0].mxu0
    %v634 = vadd.f32 0.0, %v633
    %v635 = vpop.f32.mrb[0].mxu0
    %636 = vmatprep.mubr.bf16.mxu0 0
    %637 = vmatmul.mubr.bf16.gmra.mrb[0].mxu0 %v169
    %v638 = vpop.f32.mrb[0].mxu0
    %v639 = vadd.f32 0.0, %v638
    %v640 = vpop.f32.mrb[0].mxu0
    %v641 = vpop.f32.mrb[0].mxu0
    %v642 = vadd.f32 0.0, %v641
    %v643 = vpop.f32.mrb[0].mxu0
    %644 = vmatprep.mubr.bf16.mxu0 0
    %645 = vmatmul.mubr.bf16.gmra.mrb[0].mxu0 %v170
    %v646 = vpop.f32.mrb[0].mxu0
    %v647 = vadd.f32 0.0, %v646
    %v648 = vpop.f32.mrb[0].mxu0
    %v649 = vpop.f32.mrb[0].mxu0
    %v650 = vadd.f32 0.0, %v649
    %v651 = vpop.f32.mrb[0].mxu0
    %652 = vmatprep.mubr.bf16.mxu0 0
    %653 = vmatmul.mubr.bf16.gmra.mrb[0].mxu0 %v171
    %v654 = vpop.f32.mrb[0].mxu0
    %v655 = vadd.f32 0.0, %v654
    %v656 = vpop.f32.mrb[0].mxu0
    %v657 = vpop.f32.mrb[0].mxu0
    %v658 = vadd.f32 0.0, %v657
    %v659 = vpop.f32.mrb[0].mxu0
    %660 = vmatprep.mubr.bf16.mxu0 0
    %661 = vmatmul.mubr.bf16.gmra.mrb[0].mxu0 %v172
    %v662 = vpop.f32.mrb[0].mxu0
    %v663 = vadd.f32 0.0, %v662
    %v664 = vpop.f32.mrb[0].mxu0
    %v665 = vpop.f32.mrb[0].mxu0
    %v666 = vadd.f32 0.0, %v665
    %v667 = vpop.f32.mrb[0].mxu0
    %668 = vmatprep.mubr.bf16.mxu0 0
    %669 = vmatmul.mubr.bf16.gmra.mrb[0].mxu0 %v173
    %v670 = vpop.f32.mrb[0].mxu0
    %v671 = vadd.f32 0.0, %v670
    %v672 = vpop.f32.mrb[0].mxu0
    %v673 = vpop.f32.mrb[0].mxu0
    %v674 = vadd.f32 0.0, %v673
    %v675 = vpop.f32.mrb[0].mxu0
    %676 = vmatprep.mubr.bf16.mxu0 0
    %677 = vmatmul.mubr.bf16.gmra.mrb[0].mxu0 %v174
    %v678 = vpop.f32.mrb[0].mxu0
    %v679 = vadd.f32 0.0, %v678
    %v680 = vpop.f32.mrb[0].mxu0
    %v681 = vpop.f32.mrb[0].mxu0
    %v682 = vadd.f32 0.0, %v681
    %v683 = vpop.f32.mrb[0].mxu0
    %684 = vmatprep.mubr.bf16.mxu0 0
    %685 = vmatmul.mubr.bf16.gmra.mrb[0].mxu0 %v175
    %v686 = vpop.f32.mrb[0].mxu0
    %v687 = vadd.f32 0.0, %v686
    %v688 = vpop.f32.mrb[0].mxu0
    %v689 = vpop.f32.mrb[0].mxu0
    %v690 = vadd.f32 0.0, %v689
    %v691 = vpop.f32.mrb[0].mxu0
    %692 = vdwg.mxu0
    %v693 = vmul.f32 %v631, 2.0
    %v694 = vmul.f32 %v634, 2.0
    %v695 = vmul.f32 %v639, 2.0
    %v696 = vmul.f32 %v642, 2.0
    %v697 = vmul.f32 %v647, 2.0
    %v698 = vmul.f32 %v650, 2.0
    %v699 = vmul.f32 %v655, 2.0
    %v700 = vmul.f32 %v658, 2.0
    %v701 = vmul.f32 %v663, 2.0
    %v702 = vmul.f32 %v666, 2.0
    %v703 = vmul.f32 %v671, 2.0
    %v704 = vmul.f32 %v674, 2.0
    %v705 = vmul.f32 %v679, 2.0
    %v706 = vmul.f32 %v682, 2.0
    %v707 = vmul.f32 %v687, 2.0
    %v708 = vmul.f32 %v690, 2.0
    %v709 = vsub.f32 %v693, %v80
    %v710 = vsub.f32 %v694, %v81
    %v711 = vsub.f32 %v695, %v82
    %v712 = vsub.f32 %v696, %v83
    %v713 = vsub.f32 %v697, %v84
    %v714 = vsub.f32 %v698, %v85
    %v715 = vsub.f32 %v699, %v86
    %v716 = vsub.f32 %v700, %v87
    %v717 = vsub.f32 %v701, %v88
    %v718 = vsub.f32 %v702, %v89
    %v719 = vsub.f32 %v703, %v90
    %v720 = vsub.f32 %v704, %v91
    %v721 = vsub.f32 %v705, %v92
    %v722 = vsub.f32 %v706, %v93
    %v723 = vsub.f32 %v707, %v94
    %v724 = vsub.f32 %v708, %v95
    %v725 = vpack.c.bf16 %v710, %v709
    %v726 = vpack.c.bf16 %v712, %v711
    %v727 = vpack.c.bf16 %v714, %v713
    %v728 = vpack.c.bf16 %v716, %v715
    %v729 = vpack.c.bf16 %v718, %v717
    %v730 = vpack.c.bf16 %v720, %v719
    %v731 = vpack.c.bf16 %v722, %v721
    %v732 = vpack.c.bf16 %v724, %v723
    %s733 = scalar_lea.vmem [#allocation7], 128
    %v734 = vld [vmem:[%s733] sm:$0xf]
    %v735 = vld [vmem:[%s733 + $0x4] sm:$0xf]
    %v736 = vld [vmem:[%s733 + $0x8] sm:$0xf]
    %v737 = vld [vmem:[%s733 + $0xc] sm:$0xf]
    %v738 = vld [vmem:[%s733 + $0x10] sm:$0xf]
    %v739 = vld [vmem:[%s733 + $0x14] sm:$0xf]
    %v740 = vld [vmem:[%s733 + $0x18] sm:$0xf]
    %v741 = vld [vmem:[%s733 + $0x1c] sm:$0xf]
    %v742 = vld [vmem:[%s733 + $0x20] sm:$0xf]
    %v743 = vld [vmem:[%s733 + $0x24] sm:$0xf]
    %v744 = vld [vmem:[%s733 + $0x28] sm:$0xf]
    %v745 = vld [vmem:[%s733 + $0x2c] sm:$0xf]
    %v746 = vld [vmem:[%s733 + $0x30] sm:$0xf]
    %v747 = vld [vmem:[%s733 + $0x34] sm:$0xf]
    %v748 = vld [vmem:[%s733 + $0x38] sm:$0xf]
    %v749 = vld [vmem:[%s733 + $0x3c] sm:$0xf]
    %v766 = vunpack.c.l.b16 %v734
    %v767 = vunpack.c.l.b16 %v735
    %v768 = vunpack.c.l.b16 %v736
    %v769 = vunpack.c.l.b16 %v737
    %v770 = vunpack.c.l.b16 %v738
    %v771 = vunpack.c.l.b16 %v739
    %v772 = vunpack.c.l.b16 %v740
    %v773 = vunpack.c.l.b16 %v741
    %v774 = vunpack.c.l.b16 %v742
    %v775 = vunpack.c.l.b16 %v743
    %v776 = vunpack.c.l.b16 %v744
    %v777 = vunpack.c.l.b16 %v745
    %v778 = vunpack.c.l.b16 %v746
    %v779 = vunpack.c.l.b16 %v747
    %v780 = vunpack.c.l.b16 %v748
    %v781 = vunpack.c.l.b16 %v749
    %v782 = vpack.c.b16 %v767, %v766
    %v783 = vpack.c.b16 %v769, %v768
    %v784 = vpack.c.b16 %v771, %v770
    %v785 = vpack.c.b16 %v773, %v772
    %v786 = vpack.c.b16 %v775, %v774
    %v787 = vpack.c.b16 %v777, %v776
    %v788 = vpack.c.b16 %v779, %v778
    %v789 = vpack.c.b16 %v781, %v780
    %798 = vmatprep.subr.bf16.mxu0 0
    %799 = vmatpush1.bf16.msra.mxu0 %v782
    %800 = vmatprep.subr.bf16.mxu0 0
    %801 = vmatpush1.bf16.msra.mxu0 %v783
    %802 = vmatprep.subr.bf16.mxu0 0
    %803 = vmatpush1.bf16.msra.mxu0 %v784
    %804 = vmatprep.subr.bf16.mxu0 0
    %805 = vmatpush1.bf16.msra.mxu0 %v785
    %806 = vmatprep.subr.bf16.mxu0 0
    %807 = vmatpush1.bf16.msra.mxu0 %v786
    %808 = vmatprep.subr.bf16.mxu0 0
    %809 = vmatpush1.bf16.msra.mxu0 %v787
    %810 = vmatprep.subr.bf16.mxu0 0
    %811 = vmatpush1.bf16.msra.mxu0 %v788
    %812 = vmatprep.subr.bf16.mxu0 0
    %813 = vmatpush1.bf16.msra.mxu0 %v789
    %814 = vmatprep.subr.bf16.mxu0 0
    %815 = vmatpush1.bf16.msra.mxu0 0
    %816 = vmatprep.subr.bf16.mxu0 0
    %817 = vmatpush1.bf16.msra.mxu0 0
    %818 = vmatprep.subr.bf16.mxu0 0
    %819 = vmatpush1.bf16.msra.mxu0 0
    %820 = vmatprep.subr.bf16.mxu0 0
    %821 = vmatpush1.bf16.msra.mxu0 0
    %822 = vmatprep.subr.bf16.mxu0 0
    %823 = vmatpush1.bf16.msra.mxu0 0
    %824 = vmatprep.subr.bf16.mxu0 0
    %825 = vmatpush1.bf16.msra.mxu0 0
    %826 = vmatprep.subr.bf16.mxu0 0
    %827 = vmatpush1.bf16.msra.mxu0 0
    %828 = vmatprep.subr.bf16.mxu0 0
    %829 = vmatpush1.bf16.msra.mxu0 0
    %830 = vmatprep.mubr.bf16.mxu0 0
    %831 = vmatmul.mubr.bf16.gmra.mrb[0].mxu0 %v725
    %v832 = vpop.f32.mrb[0].mxu0
    %v833 = vadd.f32 0.0, %v832
    %v834 = vpop.f32.mrb[0].mxu0
    %v835 = vpop.f32.mrb[0].mxu0
    %v836 = vadd.f32 0.0, %v835
    %v837 = vpop.f32.mrb[0].mxu0
    %838 = vmatprep.mubr.bf16.mxu0 0
    %839 = vmatmul.mubr.bf16.gmra.mrb[0].mxu0 %v726
    %v840 = vpop.f32.mrb[0].mxu0
    %v841 = vadd.f32 0.0, %v840
    %v842 = vpop.f32.mrb[0].mxu0
    %v843 = vpop.f32.mrb[0].mxu0
    %v844 = vadd.f32 0.0, %v843
    %v845 = vpop.f32.mrb[0].mxu0
    %846 = vmatprep.mubr.bf16.mxu0 0
    %847 = vmatmul.mubr.bf16.gmra.mrb[0].mxu0 %v727
    %v848 = vpop.f32.mrb[0].mxu0
    %v849 = vadd.f32 0.0, %v848
    %v850 = vpop.f32.mrb[0].mxu0
    %v851 = vpop.f32.mrb[0].mxu0
    %v852 = vadd.f32 0.0, %v851
    %v853 = vpop.f32.mrb[0].mxu0
    %854 = vmatprep.mubr.bf16.mxu0 0
    %855 = vmatmul.mubr.bf16.gmra.mrb[0].mxu0 %v728
    %v856 = vpop.f32.mrb[0].mxu0
    %v857 = vadd.f32 0.0, %v856
    %v858 = vpop.f32.mrb[0].mxu0
    %v859 = vpop.f32.mrb[0].mxu0
    %v860 = vadd.f32 0.0, %v859
    %v861 = vpop.f32.mrb[0].mxu0
    %862 = vmatprep.mubr.bf16.mxu0 0
    %863 = vmatmul.mubr.bf16.gmra.mrb[0].mxu0 %v729
    %v864 = vpop.f32.mrb[0].mxu0
    %v865 = vadd.f32 0.0, %v864
    %v866 = vpop.f32.mrb[0].mxu0
    %v867 = vpop.f32.mrb[0].mxu0
    %v868 = vadd.f32 0.0, %v867
    %v869 = vpop.f32.mrb[0].mxu0
    %870 = vmatprep.mubr.bf16.mxu0 0
    %871 = vmatmul.mubr.bf16.gmra.mrb[0].mxu0 %v730
    %v872 = vpop.f32.mrb[0].mxu0
    %v873 = vadd.f32 0.0, %v872
    %v874 = vpop.f32.mrb[0].mxu0
    %v875 = vpop.f32.mrb[0].mxu0
    %v876 = vadd.f32 0.0, %v875
    %v877 = vpop.f32.mrb[0].mxu0
    %878 = vmatprep.mubr.bf16.mxu0 0
    %879 = vmatmul.mubr.bf16.gmra.mrb[0].mxu0 %v731
    %v880 = vpop.f32.mrb[0].mxu0
    %v881 = vadd.f32 0.0, %v880
    %v882 = vpop.f32.mrb[0].mxu0
    %v883 = vpop.f32.mrb[0].mxu0
    %v884 = vadd.f32 0.0, %v883
    %v885 = vpop.f32.mrb[0].mxu0
    %886 = vmatprep.mubr.bf16.mxu0 0
    %887 = vmatmul.mubr.bf16.gmra.mrb[0].mxu0 %v732
    %v888 = vpop.f32.mrb[0].mxu0
    %v889 = vadd.f32 0.0, %v888
    %v890 = vpop.f32.mrb[0].mxu0
    %v891 = vpop.f32.mrb[0].mxu0
    %v892 = vadd.f32 0.0, %v891
    %v893 = vpop.f32.mrb[0].mxu0
    %894 = vdwg.mxu0
    %v895 = vadd.f32 %v534, %v833
    %v896 = vadd.f32 %v537, %v836
    %v897 = vadd.f32 %v542, %v841
    %v898 = vadd.f32 %v545, %v844
    %v899 = vadd.f32 %v550, %v849
    %v900 = vadd.f32 %v553, %v852
    %v901 = vadd.f32 %v558, %v857
    %v902 = vadd.f32 %v561, %v860
    %v903 = vadd.f32 %v566, %v865
    %v904 = vadd.f32 %v569, %v868
    %v905 = vadd.f32 %v574, %v873
    %v906 = vadd.f32 %v577, %v876
    %v907 = vadd.f32 %v582, %v881
    %v908 = vadd.f32 %v585, %v884
    %v909 = vadd.f32 %v590, %v889
    %v910 = vadd.f32 %v593, %v892
    %v911 = vld [vmem:[%s3] sm:$0x1]
    %v913 = vlaneseq
    %v914 = vshrl.u32 %v913, 7
    %v915 = vsub.s32 0, %v914
    %v916 = vrot.slane %v911, %v915
    %v918 = vadd.f32 %v895, %v916
    %v919 = vadd.f32 %v896, %v916
    %v920 = vadd.f32 %v897, %v916
    %v921 = vadd.f32 %v898, %v916
    %v922 = vadd.f32 %v899, %v916
    %v923 = vadd.f32 %v900, %v916
    %v924 = vadd.f32 %v901, %v916
    %v925 = vadd.f32 %v902, %v916
    %v926 = vadd.f32 %v903, %v916
    %v927 = vadd.f32 %v904, %v916
    %v928 = vadd.f32 %v905, %v916
    %v929 = vadd.f32 %v906, %v916
    %v930 = vadd.f32 %v907, %v916
    %v931 = vadd.f32 %v908, %v916
    %v932 = vadd.f32 %v909, %v916
    %v933 = vadd.f32 %v910, %v916
    %v934 = vmax.f32 %v918, 0.0
    %v935 = vmax.f32 %v919, 0.0
    %v936 = vmax.f32 %v920, 0.0
    %v937 = vmax.f32 %v921, 0.0
    %v938 = vmax.f32 %v922, 0.0
    %v939 = vmax.f32 %v923, 0.0
    %v940 = vmax.f32 %v924, 0.0
    %v941 = vmax.f32 %v925, 0.0
    %v942 = vmax.f32 %v926, 0.0
    %v943 = vmax.f32 %v927, 0.0
    %v944 = vmax.f32 %v928, 0.0
    %v945 = vmax.f32 %v929, 0.0
    %v946 = vmax.f32 %v930, 0.0
    %v947 = vmax.f32 %v931, 0.0
    %v948 = vmax.f32 %v932, 0.0
    %v949 = vmax.f32 %v933, 0.0
    %v950 = vpack.c.bf16 %v935, %v934
    %v951 = vpack.c.bf16 %v937, %v936
    %v952 = vpack.c.bf16 %v939, %v938
    %v953 = vpack.c.bf16 %v941, %v940
    %v954 = vpack.c.bf16 %v943, %v942
    %v955 = vpack.c.bf16 %v945, %v944
    %v956 = vpack.c.bf16 %v947, %v946
    %v957 = vpack.c.bf16 %v949, %v948
    %v958 = vld [vmem:[#allocation8] sm:$0xf]
    %v959 = vld [vmem:[#allocation8 + $0x4] sm:$0xf]
    %v960 = vld [vmem:[#allocation8 + $0x8] sm:$0xf]
    %v961 = vld [vmem:[#allocation8 + $0xc] sm:$0xf]
    %v962 = vld [vmem:[#allocation8 + $0x10] sm:$0xf]
    %v963 = vld [vmem:[#allocation8 + $0x14] sm:$0xf]
    %v964 = vld [vmem:[#allocation8 + $0x18] sm:$0xf]
    %v965 = vld [vmem:[#allocation8 + $0x1c] sm:$0xf]
    %v966 = vld [vmem:[#allocation8 + $0x20] sm:$0xf]
    %v967 = vld [vmem:[#allocation8 + $0x24] sm:$0xf]
    %v968 = vld [vmem:[#allocation8 + $0x28] sm:$0xf]
    %v969 = vld [vmem:[#allocation8 + $0x2c] sm:$0xf]
    %v970 = vld [vmem:[#allocation8 + $0x30] sm:$0xf]
    %v971 = vld [vmem:[#allocation8 + $0x34] sm:$0xf]
    %v972 = vld [vmem:[#allocation8 + $0x38] sm:$0xf]
    %v973 = vld [vmem:[#allocation8 + $0x3c] sm:$0xf]
    %974 = vmatprep.subr.bf16.mxu0 0
    %975 = vmatpush1.bf16.msra.mxu0 %v950
    %976 = vmatprep.subr.bf16.mxu0 0
    %977 = vmatpush1.bf16.msra.mxu0 %v951
    %978 = vmatprep.subr.bf16.mxu0 0
    %979 = vmatpush1.bf16.msra.mxu0 %v952
    %980 = vmatprep.subr.bf16.mxu0 0
    %981 = vmatpush1.bf16.msra.mxu0 %v953
    %982 = vmatprep.subr.bf16.mxu0 0
    %983 = vmatpush1.bf16.msra.mxu0 %v954
    %984 = vmatprep.subr.bf16.mxu0 0
    %985 = vmatpush1.bf16.msra.mxu0 %v955
    %986 = vmatprep.subr.bf16.mxu0 0
    %987 = vmatpush1.bf16.msra.mxu0 %v956
    %988 = vmatprep.subr.bf16.mxu0 0
    %989 = vmatpush1.bf16.msra.mxu0 %v957
    %990 = vmatprep.subr.bf16.mxu0 0
    %991 = vmatpush1.bf16.msra.mxu0 0
    %992 = vmatprep.subr.bf16.mxu0 0
    %993 = vmatpush1.bf16.msra.mxu0 0
    %994 = vmatprep.subr.bf16.mxu0 0
    %995 = vmatpush1.bf16.msra.mxu0 0
    %996 = vmatprep.subr.bf16.mxu0 0
    %997 = vmatpush1.bf16.msra.mxu0 0
    %998 = vmatprep.subr.bf16.mxu0 0
    %999 = vmatpush1.bf16.msra.mxu0 0
    %1000 = vmatprep.subr.bf16.mxu0 0
    %1001 = vmatpush1.bf16.msra.mxu0 0
    %1002 = vmatprep.subr.bf16.mxu0 0
    %1003 = vmatpush1.bf16.msra.mxu0 0
    %1004 = vmatprep.subr.bf16.mxu0 0
    %1005 = vmatpush1.bf16.msra.mxu0 0
    %1006 = vmatprep.mubr.bf16.mxu0 0
    %1007 = vmatmul.mubr.bf16.gmra.mrb[0].mxu0 %v168
    %v1008 = vpop.f32.mrb[0].mxu0
    %v1009 = vadd.f32 0.0, %v1008
    %v1010 = vpop.f32.mrb[0].mxu0
    %v1011 = vpop.f32.mrb[0].mxu0
    %v1012 = vadd.f32 0.0, %v1011
    %v1013 = vpop.f32.mrb[0].mxu0
    %1014 = vmatprep.mubr.bf16.mxu0 0
    %1015 = vmatmul.mubr.bf16.gmra.mrb[0].mxu0 %v169
    %v1016 = vpop.f32.mrb[0].mxu0
    %v1017 = vadd.f32 0.0, %v1016
    %v1018 = vpop.f32.mrb[0].mxu0
    %v1019 = vpop.f32.mrb[0].mxu0
    %v1020 = vadd.f32 0.0, %v1019
    %v1021 = vpop.f32.mrb[0].mxu0
    %1022 = vmatprep.mubr.bf16.mxu0 0
    %1023 = vmatmul.mubr.bf16.gmra.mrb[0].mxu0 %v170
    %v1024 = vpop.f32.mrb[0].mxu0
    %v1025 = vadd.f32 0.0, %v1024
    %v1026 = vpop.f32.mrb[0].mxu0
    %v1027 = vpop.f32.mrb[0].mxu0
    %v1028 = vadd.f32 0.0, %v1027
    %v1029 = vpop.f32.mrb[0].mxu0
    %1030 = vmatprep.mubr.bf16.mxu0 0
    %1031 = vmatmul.mubr.bf16.gmra.mrb[0].mxu0 %v171
    %v1032 = vpop.f32.mrb[0].mxu0
    %v1033 = vadd.f32 0.0, %v1032
    %v1034 = vpop.f32.mrb[0].mxu0
    %v1035 = vpop.f32.mrb[0].mxu0
    %v1036 = vadd.f32 0.0, %v1035
    %v1037 = vpop.f32.mrb[0].mxu0
    %1038 = vmatprep.mubr.bf16.mxu0 0
    %1039 = vmatmul.mubr.bf16.gmra.mrb[0].mxu0 %v172
    %v1040 = vpop.f32.mrb[0].mxu0
    %v1041 = vadd.f32 0.0, %v1040
    %v1042 = vpop.f32.mrb[0].mxu0
    %v1043 = vpop.f32.mrb[0].mxu0
    %v1044 = vadd.f32 0.0, %v1043
    %v1045 = vpop.f32.mrb[0].mxu0
    %1046 = vmatprep.mubr.bf16.mxu0 0
    %1047 = vmatmul.mubr.bf16.gmra.mrb[0].mxu0 %v173
    %v1048 = vpop.f32.mrb[0].mxu0
    %v1049 = vadd.f32 0.0, %v1048
    %v1050 = vpop.f32.mrb[0].mxu0
    %v1051 = vpop.f32.mrb[0].mxu0
    %v1052 = vadd.f32 0.0, %v1051
    %v1053 = vpop.f32.mrb[0].mxu0
    %1054 = vmatprep.mubr.bf16.mxu0 0
    %1055 = vmatmul.mubr.bf16.gmra.mrb[0].mxu0 %v174
    %v1056 = vpop.f32.mrb[0].mxu0
    %v1057 = vadd.f32 0.0, %v1056
    %v1058 = vpop.f32.mrb[0].mxu0
    %v1059 = vpop.f32.mrb[0].mxu0
    %v1060 = vadd.f32 0.0, %v1059
    %v1061 = vpop.f32.mrb[0].mxu0
    %1062 = vmatprep.mubr.bf16.mxu0 0
    %1063 = vmatmul.mubr.bf16.gmra.mrb[0].mxu0 %v175
    %v1064 = vpop.f32.mrb[0].mxu0
    %v1065 = vadd.f32 0.0, %v1064
    %v1066 = vpop.f32.mrb[0].mxu0
    %v1067 = vpop.f32.mrb[0].mxu0
    %v1068 = vadd.f32 0.0, %v1067
    %v1069 = vpop.f32.mrb[0].mxu0
    %1070 = vdwg.mxu0
    %v1071 = vpack.c.bf16 %v1012, %v1009
    %v1072 = vpack.c.bf16 %v1020, %v1017
    %v1073 = vpack.c.bf16 %v1028, %v1025
    %v1074 = vpack.c.bf16 %v1036, %v1033
    %v1075 = vpack.c.bf16 %v1044, %v1041
    %v1076 = vpack.c.bf16 %v1052, %v1049
    %v1077 = vpack.c.bf16 %v1060, %v1057
    %v1078 = vpack.c.bf16 %v1068, %v1065
    %s1079 = scalar_lea.vmem [#allocation8], 64
    %v1080 = vld [vmem:[%s1079] sm:$0xf]
    %v1081 = vld [vmem:[%s1079 + $0x4] sm:$0xf]
    %v1082 = vld [vmem:[%s1079 + $0x8] sm:$0xf]
    %v1083 = vld [vmem:[%s1079 + $0xc] sm:$0xf]
    %v1084 = vld [vmem:[%s1079 + $0x10] sm:$0xf]
    %v1085 = vld [vmem:[%s1079 + $0x14] sm:$0xf]
    %v1086 = vld [vmem:[%s1079 + $0x18] sm:$0xf]
    %v1087 = vld [vmem:[%s1079 + $0x1c] sm:$0xf]
    %v1088 = vld [vmem:[%s1079 + $0x20] sm:$0xf]
    %v1089 = vld [vmem:[%s1079 + $0x24] sm:$0xf]
    %v1090 = vld [vmem:[%s1079 + $0x28] sm:$0xf]
    %v1091 = vld [vmem:[%s1079 + $0x2c] sm:$0xf]
    %v1092 = vld [vmem:[%s1079 + $0x30] sm:$0xf]
    %v1093 = vld [vmem:[%s1079 + $0x34] sm:$0xf]
    %v1094 = vld [vmem:[%s1079 + $0x38] sm:$0xf]
    %v1095 = vld [vmem:[%s1079 + $0x3c] sm:$0xf]
    %v1112 = vunpack.c.l.b16 %v1080
    %v1113 = vunpack.c.l.b16 %v1081
    %v1114 = vunpack.c.l.b16 %v1082
    %v1115 = vunpack.c.l.b16 %v1083
    %v1116 = vunpack.c.l.b16 %v1084
    %v1117 = vunpack.c.l.b16 %v1085
    %v1118 = vunpack.c.l.b16 %v1086
    %v1119 = vunpack.c.l.b16 %v1087
    %v1120 = vunpack.c.l.b16 %v1088
    %v1121 = vunpack.c.l.b16 %v1089
    %v1122 = vunpack.c.l.b16 %v1090
    %v1123 = vunpack.c.l.b16 %v1091
    %v1124 = vunpack.c.l.b16 %v1092
    %v1125 = vunpack.c.l.b16 %v1093
    %v1126 = vunpack.c.l.b16 %v1094
    %v1127 = vunpack.c.l.b16 %v1095
    %v1128 = vpack.c.b16 %v1113, %v1112
    %v1129 = vpack.c.b16 %v1115, %v1114
    %v1130 = vpack.c.b16 %v1117, %v1116
    %v1131 = vpack.c.b16 %v1119, %v1118
    %v1132 = vpack.c.b16 %v1121, %v1120
    %v1133 = vpack.c.b16 %v1123, %v1122
    %v1134 = vpack.c.b16 %v1125, %v1124
    %v1135 = vpack.c.b16 %v1127, %v1126
    %1144 = vmatprep.subr.bf16.mxu0 0
    %1145 = vmatpush1.bf16.msra.mxu0 %v1128
    %1146 = vmatprep.subr.bf16.mxu0 0
    %1147 = vmatpush1.bf16.msra.mxu0 %v1129
    %1148 = vmatprep.subr.bf16.mxu0 0
    %1149 = vmatpush1.bf16.msra.mxu0 %v1130
    %1150 = vmatprep.subr.bf16.mxu0 0
    %1151 = vmatpush1.bf16.msra.mxu0 %v1131
    %1152 = vmatprep.subr.bf16.mxu0 0
    %1153 = vmatpush1.bf16.msra.mxu0 %v1132
    %1154 = vmatprep.subr.bf16.mxu0 0
    %1155 = vmatpush1.bf16.msra.mxu0 %v1133
    %1156 = vmatprep.subr.bf16.mxu0 0
    %1157 = vmatpush1.bf16.msra.mxu0 %v1134
    %1158 = vmatprep.subr.bf16.mxu0 0
    %1159 = vmatpush1.bf16.msra.mxu0 %v1135
    %1160 = vmatprep.subr.bf16.mxu0 0
    %1161 = vmatpush1.bf16.msra.mxu0 0
    %1162 = vmatprep.subr.bf16.mxu0 0
    %1163 = vmatpush1.bf16.msra.mxu0 0
    %1164 = vmatprep.subr.bf16.mxu0 0
    %1165 = vmatpush1.bf16.msra.mxu0 0
    %1166 = vmatprep.subr.bf16.mxu0 0
    %1167 = vmatpush1.bf16.msra.mxu0 0
    %1168 = vmatprep.subr.bf16.mxu0 0
    %1169 = vmatpush1.bf16.msra.mxu0 0
    %1170 = vmatprep.subr.bf16.mxu0 0
    %1171 = vmatpush1.bf16.msra.mxu0 0
    %1172 = vmatprep.subr.bf16.mxu0 0
    %1173 = vmatpush1.bf16.msra.mxu0 0
    %1174 = vmatprep.subr.bf16.mxu0 0
    %1175 = vmatpush1.bf16.msra.mxu0 0
    %1176 = vmatprep.mubr.bf16.mxu0 0
    %1177 = vmatmul.mubr.bf16.gmra.mrb[0].mxu0 %v1071
    %v1178 = vpop.f32.mrb[0].mxu0
    %v1179 = vadd.f32 0.0, %v1178
    %v1180 = vpop.f32.mrb[0].mxu0
    %v1181 = vpop.f32.mrb[0].mxu0
    %v1182 = vadd.f32 0.0, %v1181
    %v1183 = vpop.f32.mrb[0].mxu0
    %1184 = vmatprep.mubr.bf16.mxu0 0
    %1185 = vmatmul.mubr.bf16.gmra.mrb[0].mxu0 %v1072
    %v1186 = vpop.f32.mrb[0].mxu0
    %v1187 = vadd.f32 0.0, %v1186
    %v1188 = vpop.f32.mrb[0].mxu0
    %v1189 = vpop.f32.mrb[0].mxu0
    %v1190 = vadd.f32 0.0, %v1189
    %v1191 = vpop.f32.mrb[0].mxu0
    %1192 = vmatprep.mubr.bf16.mxu0 0
    %1193 = vmatmul.mubr.bf16.gmra.mrb[0].mxu0 %v1073
    %v1194 = vpop.f32.mrb[0].mxu0
    %v1195 = vadd.f32 0.0, %v1194
    %v1196 = vpop.f32.mrb[0].mxu0
    %v1197 = vpop.f32.mrb[0].mxu0
    %v1198 = vadd.f32 0.0, %v1197
    %v1199 = vpop.f32.mrb[0].mxu0
    %1200 = vmatprep.mubr.bf16.mxu0 0
    %1201 = vmatmul.mubr.bf16.gmra.mrb[0].mxu0 %v1074
    %v1202 = vpop.f32.mrb[0].mxu0
    %v1203 = vadd.f32 0.0, %v1202
    %v1204 = vpop.f32.mrb[0].mxu0
    %v1205 = vpop.f32.mrb[0].mxu0
    %v1206 = vadd.f32 0.0, %v1205
    %v1207 = vpop.f32.mrb[0].mxu0
    %1208 = vmatprep.mubr.bf16.mxu0 0
    %1209 = vmatmul.mubr.bf16.gmra.mrb[0].mxu0 %v1075
    %v1210 = vpop.f32.mrb[0].mxu0
    %v1211 = vadd.f32 0.0, %v1210
    %v1212 = vpop.f32.mrb[0].mxu0
    %v1213 = vpop.f32.mrb[0].mxu0
    %v1214 = vadd.f32 0.0, %v1213
    %v1215 = vpop.f32.mrb[0].mxu0
    %1216 = vmatprep.mubr.bf16.mxu0 0
    %1217 = vmatmul.mubr.bf16.gmra.mrb[0].mxu0 %v1076
    %v1218 = vpop.f32.mrb[0].mxu0
    %v1219 = vadd.f32 0.0, %v1218
    %v1220 = vpop.f32.mrb[0].mxu0
    %v1221 = vpop.f32.mrb[0].mxu0
    %v1222 = vadd.f32 0.0, %v1221
    %v1223 = vpop.f32.mrb[0].mxu0
    %1224 = vmatprep.mubr.bf16.mxu0 0
    %1225 = vmatmul.mubr.bf16.gmra.mrb[0].mxu0 %v1077
    %v1226 = vpop.f32.mrb[0].mxu0
    %v1227 = vadd.f32 0.0, %v1226
    %v1228 = vpop.f32.mrb[0].mxu0
    %v1229 = vpop.f32.mrb[0].mxu0
    %v1230 = vadd.f32 0.0, %v1229
    %v1231 = vpop.f32.mrb[0].mxu0
    %1232 = vmatprep.mubr.bf16.mxu0 0
    %1233 = vmatmul.mubr.bf16.gmra.mrb[0].mxu0 %v1078
    %v1234 = vpop.f32.mrb[0].mxu0
    %v1235 = vadd.f32 0.0, %v1234
    %v1236 = vpop.f32.mrb[0].mxu0
    %v1237 = vpop.f32.mrb[0].mxu0
    %v1238 = vadd.f32 0.0, %v1237
    %v1239 = vpop.f32.mrb[0].mxu0
    %1240 = vdwg.mxu0
    %v1257 = vunpack.c.l.b16 %v958
    %v1258 = vunpack.c.l.b16 %v959
    %v1259 = vunpack.c.l.b16 %v960
    %v1260 = vunpack.c.l.b16 %v961
    %v1261 = vunpack.c.l.b16 %v962
    %v1262 = vunpack.c.l.b16 %v963
    %v1263 = vunpack.c.l.b16 %v964
    %v1264 = vunpack.c.l.b16 %v965
    %v1265 = vunpack.c.l.b16 %v966
    %v1266 = vunpack.c.l.b16 %v967
    %v1267 = vunpack.c.l.b16 %v968
    %v1268 = vunpack.c.l.b16 %v969
    %v1269 = vunpack.c.l.b16 %v970
    %v1270 = vunpack.c.l.b16 %v971
    %v1271 = vunpack.c.l.b16 %v972
    %v1272 = vunpack.c.l.b16 %v973
    %v1273 = vpack.c.b16 %v1258, %v1257
    %v1274 = vpack.c.b16 %v1260, %v1259
    %v1275 = vpack.c.b16 %v1262, %v1261
    %v1276 = vpack.c.b16 %v1264, %v1263
    %v1277 = vpack.c.b16 %v1266, %v1265
    %v1278 = vpack.c.b16 %v1268, %v1267
    %v1279 = vpack.c.b16 %v1270, %v1269
    %v1280 = vpack.c.b16 %v1272, %v1271
    %1289 = vmatprep.subr.bf16.mxu0 0
    %1290 = vmatpush1.bf16.msra.mxu0 %v1273
    %1291 = vmatprep.subr.bf16.mxu0 0
    %1292 = vmatpush1.bf16.msra.mxu0 %v1274
    %1293 = vmatprep.subr.bf16.mxu0 0
    %1294 = vmatpush1.bf16.msra.mxu0 %v1275
    %1295 = vmatprep.subr.bf16.mxu0 0
    %1296 = vmatpush1.bf16.msra.mxu0 %v1276
    %1297 = vmatprep.subr.bf16.mxu0 0
    %1298 = vmatpush1.bf16.msra.mxu0 %v1277
    %1299 = vmatprep.subr.bf16.mxu0 0
    %1300 = vmatpush1.bf16.msra.mxu0 %v1278
    %1301 = vmatprep.subr.bf16.mxu0 0
    %1302 = vmatpush1.bf16.msra.mxu0 %v1279
    %1303 = vmatprep.subr.bf16.mxu0 0
    %1304 = vmatpush1.bf16.msra.mxu0 %v1280
    %1305 = vmatprep.subr.bf16.mxu0 0
    %1306 = vmatpush1.bf16.msra.mxu0 0
    %1307 = vmatprep.subr.bf16.mxu0 0
    %1308 = vmatpush1.bf16.msra.mxu0 0
    %1309 = vmatprep.subr.bf16.mxu0 0
    %1310 = vmatpush1.bf16.msra.mxu0 0
    %1311 = vmatprep.subr.bf16.mxu0 0
    %1312 = vmatpush1.bf16.msra.mxu0 0
    %1313 = vmatprep.subr.bf16.mxu0 0
    %1314 = vmatpush1.bf16.msra.mxu0 0
    %1315 = vmatprep.subr.bf16.mxu0 0
    %1316 = vmatpush1.bf16.msra.mxu0 0
    %1317 = vmatprep.subr.bf16.mxu0 0
    %1318 = vmatpush1.bf16.msra.mxu0 0
    %1319 = vmatprep.subr.bf16.mxu0 0
    %1320 = vmatpush1.bf16.msra.mxu0 0
    %1321 = vmatprep.mubr.bf16.mxu0 0
    %1322 = vmatmul.mubr.bf16.gmra.mrb[0].mxu0 %v950
    %v1323 = vpop.f32.mrb[0].mxu0
    %v1324 = vadd.f32 %v1179, %v1323
    %v1325 = vpop.f32.mrb[0].mxu0
    %v1326 = vpop.f32.mrb[0].mxu0
    %v1327 = vadd.f32 %v1182, %v1326
    %v1328 = vpop.f32.mrb[0].mxu0
    %1329 = vmatprep.mubr.bf16.mxu0 0
    %1330 = vmatmul.mubr.bf16.gmra.mrb[0].mxu0 %v951
    %v1331 = vpop.f32.mrb[0].mxu0
    %v1332 = vadd.f32 %v1187, %v1331
    %v1333 = vpop.f32.mrb[0].mxu0
    %v1334 = vpop.f32.mrb[0].mxu0
    %v1335 = vadd.f32 %v1190, %v1334
    %v1336 = vpop.f32.mrb[0].mxu0
    %1337 = vmatprep.mubr.bf16.mxu0 0
    %1338 = vmatmul.mubr.bf16.gmra.mrb[0].mxu0 %v952
    %v1339 = vpop.f32.mrb[0].mxu0
    %v1340 = vadd.f32 %v1195, %v1339
    %v1341 = vpop.f32.mrb[0].mxu0
    %v1342 = vpop.f32.mrb[0].mxu0
    %v1343 = vadd.f32 %v1198, %v1342
    %v1344 = vpop.f32.mrb[0].mxu0
    %1345 = vmatprep.mubr.bf16.mxu0 0
    %1346 = vmatmul.mubr.bf16.gmra.mrb[0].mxu0 %v953
    %v1347 = vpop.f32.mrb[0].mxu0
    %v1348 = vadd.f32 %v1203, %v1347
    %v1349 = vpop.f32.mrb[0].mxu0
    %v1350 = vpop.f32.mrb[0].mxu0
    %v1351 = vadd.f32 %v1206, %v1350
    %v1352 = vpop.f32.mrb[0].mxu0
    %1353 = vmatprep.mubr.bf16.mxu0 0
    %1354 = vmatmul.mubr.bf16.gmra.mrb[0].mxu0 %v954
    %v1355 = vpop.f32.mrb[0].mxu0
    %v1356 = vadd.f32 %v1211, %v1355
    %v1357 = vpop.f32.mrb[0].mxu0
    %v1358 = vpop.f32.mrb[0].mxu0
    %v1359 = vadd.f32 %v1214, %v1358
    %v1360 = vpop.f32.mrb[0].mxu0
    %1361 = vmatprep.mubr.bf16.mxu0 0
    %1362 = vmatmul.mubr.bf16.gmra.mrb[0].mxu0 %v955
    %v1363 = vpop.f32.mrb[0].mxu0
    %v1364 = vadd.f32 %v1219, %v1363
    %v1365 = vpop.f32.mrb[0].mxu0
    %v1366 = vpop.f32.mrb[0].mxu0
    %v1367 = vadd.f32 %v1222, %v1366
    %v1368 = vpop.f32.mrb[0].mxu0
    %1369 = vmatprep.mubr.bf16.mxu0 0
    %1370 = vmatmul.mubr.bf16.gmra.mrb[0].mxu0 %v956
    %v1371 = vpop.f32.mrb[0].mxu0
    %v1372 = vadd.f32 %v1227, %v1371
    %v1373 = vpop.f32.mrb[0].mxu0
    %v1374 = vpop.f32.mrb[0].mxu0
    %v1375 = vadd.f32 %v1230, %v1374
    %v1376 = vpop.f32.mrb[0].mxu0
    %1377 = vmatprep.mubr.bf16.mxu0 0
    %1378 = vmatmul.mubr.bf16.gmra.mrb[0].mxu0 %v957
    %v1379 = vpop.f32.mrb[0].mxu0
    %v1380 = vadd.f32 %v1235, %v1379
    %v1381 = vpop.f32.mrb[0].mxu0
    %v1382 = vpop.f32.mrb[0].mxu0
    %v1383 = vadd.f32 %v1238, %v1382
    %v1384 = vpop.f32.mrb[0].mxu0
    %1385 = vdwg.mxu0
    %1386 = vmatprep.subr.bf16.mxu0 0
    %1387 = vmatpush1.bf16.msra.mxu0 %v1071
    %1388 = vmatprep.subr.bf16.mxu0 0
    %1389 = vmatpush1.bf16.msra.mxu0 %v1072
    %1390 = vmatprep.subr.bf16.mxu0 0
    %1391 = vmatpush1.bf16.msra.mxu0 %v1073
    %1392 = vmatprep.subr.bf16.mxu0 0
    %1393 = vmatpush1.bf16.msra.mxu0 %v1074
    %1394 = vmatprep.subr.bf16.mxu0 0
    %1395 = vmatpush1.bf16.msra.mxu0 %v1075
    %1396 = vmatprep.subr.bf16.mxu0 0
    %1397 = vmatpush1.bf16.msra.mxu0 %v1076
    %1398 = vmatprep.subr.bf16.mxu0 0
    %1399 = vmatpush1.bf16.msra.mxu0 %v1077
    %1400 = vmatprep.subr.bf16.mxu0 0
    %1401 = vmatpush1.bf16.msra.mxu0 %v1078
    %1402 = vmatprep.subr.bf16.mxu0 0
    %1403 = vmatpush1.bf16.msra.mxu0 0
    %1404 = vmatprep.subr.bf16.mxu0 0
    %1405 = vmatpush1.bf16.msra.mxu0 0
    %1406 = vmatprep.subr.bf16.mxu0 0
    %1407 = vmatpush1.bf16.msra.mxu0 0
    %1408 = vmatprep.subr.bf16.mxu0 0
    %1409 = vmatpush1.bf16.msra.mxu0 0
    %1410 = vmatprep.subr.bf16.mxu0 0
    %1411 = vmatpush1.bf16.msra.mxu0 0
    %1412 = vmatprep.subr.bf16.mxu0 0
    %1413 = vmatpush1.bf16.msra.mxu0 0
    %1414 = vmatprep.subr.bf16.mxu0 0
    %1415 = vmatpush1.bf16.msra.mxu0 0
    %1416 = vmatprep.subr.bf16.mxu0 0
    %1417 = vmatpush1.bf16.msra.mxu0 0
    %1418 = vmatprep.mubr.bf16.mxu0 0
    %1419 = vmatmul.mubr.bf16.gmra.mrb[0].mxu0 %v168
    %v1420 = vpop.f32.mrb[0].mxu0
    %v1421 = vadd.f32 0.0, %v1420
    %v1422 = vpop.f32.mrb[0].mxu0
    %v1423 = vpop.f32.mrb[0].mxu0
    %v1424 = vadd.f32 0.0, %v1423
    %v1425 = vpop.f32.mrb[0].mxu0
    %1426 = vmatprep.mubr.bf16.mxu0 0
    %1427 = vmatmul.mubr.bf16.gmra.mrb[0].mxu0 %v169
    %v1428 = vpop.f32.mrb[0].mxu0
    %v1429 = vadd.f32 0.0, %v1428
    %v1430 = vpop.f32.mrb[0].mxu0
    %v1431 = vpop.f32.mrb[0].mxu0
    %v1432 = vadd.f32 0.0, %v1431
    %v1433 = vpop.f32.mrb[0].mxu0
    %1434 = vmatprep.mubr.bf16.mxu0 0
    %1435 = vmatmul.mubr.bf16.gmra.mrb[0].mxu0 %v170
    %v1436 = vpop.f32.mrb[0].mxu0
    %v1437 = vadd.f32 0.0, %v1436
    %v1438 = vpop.f32.mrb[0].mxu0
    %v1439 = vpop.f32.mrb[0].mxu0
    %v1440 = vadd.f32 0.0, %v1439
    %v1441 = vpop.f32.mrb[0].mxu0
    %1442 = vmatprep.mubr.bf16.mxu0 0
    %1443 = vmatmul.mubr.bf16.gmra.mrb[0].mxu0 %v171
    %v1444 = vpop.f32.mrb[0].mxu0
    %v1445 = vadd.f32 0.0, %v1444
    %v1446 = vpop.f32.mrb[0].mxu0
    %v1447 = vpop.f32.mrb[0].mxu0
    %v1448 = vadd.f32 0.0, %v1447
    %v1449 = vpop.f32.mrb[0].mxu0
    %1450 = vmatprep.mubr.bf16.mxu0 0
    %1451 = vmatmul.mubr.bf16.gmra.mrb[0].mxu0 %v172
    %v1452 = vpop.f32.mrb[0].mxu0
    %v1453 = vadd.f32 0.0, %v1452
    %v1454 = vpop.f32.mrb[0].mxu0
    %v1455 = vpop.f32.mrb[0].mxu0
    %v1456 = vadd.f32 0.0, %v1455
    %v1457 = vpop.f32.mrb[0].mxu0
    %1458 = vmatprep.mubr.bf16.mxu0 0
    %1459 = vmatmul.mubr.bf16.gmra.mrb[0].mxu0 %v173
    %v1460 = vpop.f32.mrb[0].mxu0
    %v1461 = vadd.f32 0.0, %v1460
    %v1462 = vpop.f32.mrb[0].mxu0
    %v1463 = vpop.f32.mrb[0].mxu0
    %v1464 = vadd.f32 0.0, %v1463
    %v1465 = vpop.f32.mrb[0].mxu0
    %1466 = vmatprep.mubr.bf16.mxu0 0
    %1467 = vmatmul.mubr.bf16.gmra.mrb[0].mxu0 %v174
    %v1468 = vpop.f32.mrb[0].mxu0
    %v1469 = vadd.f32 0.0, %v1468
    %v1470 = vpop.f32.mrb[0].mxu0
    %v1471 = vpop.f32.mrb[0].mxu0
    %v1472 = vadd.f32 0.0, %v1471
    %v1473 = vpop.f32.mrb[0].mxu0
    %1474 = vmatprep.mubr.bf16.mxu0 0
    %1475 = vmatmul.mubr.bf16.gmra.mrb[0].mxu0 %v175
    %v1476 = vpop.f32.mrb[0].mxu0
    %v1477 = vadd.f32 0.0, %v1476
    %v1478 = vpop.f32.mrb[0].mxu0
    %v1479 = vpop.f32.mrb[0].mxu0
    %v1480 = vadd.f32 0.0, %v1479
    %v1481 = vpop.f32.mrb[0].mxu0
    %1482 = vdwg.mxu0
    %v1483 = vmul.f32 %v1421, 2.0
    %v1484 = vmul.f32 %v1424, 2.0
    %v1485 = vmul.f32 %v1429, 2.0
    %v1486 = vmul.f32 %v1432, 2.0
    %v1487 = vmul.f32 %v1437, 2.0
    %v1488 = vmul.f32 %v1440, 2.0
    %v1489 = vmul.f32 %v1445, 2.0
    %v1490 = vmul.f32 %v1448, 2.0
    %v1491 = vmul.f32 %v1453, 2.0
    %v1492 = vmul.f32 %v1456, 2.0
    %v1493 = vmul.f32 %v1461, 2.0
    %v1494 = vmul.f32 %v1464, 2.0
    %v1495 = vmul.f32 %v1469, 2.0
    %v1496 = vmul.f32 %v1472, 2.0
    %v1497 = vmul.f32 %v1477, 2.0
    %v1498 = vmul.f32 %v1480, 2.0
    %v1499 = vsub.f32 %v1483, %v934
    %v1500 = vsub.f32 %v1484, %v935
    %v1501 = vsub.f32 %v1485, %v936
    %v1502 = vsub.f32 %v1486, %v937
    %v1503 = vsub.f32 %v1487, %v938
    %v1504 = vsub.f32 %v1488, %v939
    %v1505 = vsub.f32 %v1489, %v940
    %v1506 = vsub.f32 %v1490, %v941
    %v1507 = vsub.f32 %v1491, %v942
    %v1508 = vsub.f32 %v1492, %v943
    %v1509 = vsub.f32 %v1493, %v944
    %v1510 = vsub.f32 %v1494, %v945
    %v1511 = vsub.f32 %v1495, %v946
    %v1512 = vsub.f32 %v1496, %v947
    %v1513 = vsub.f32 %v1497, %v948
    %v1514 = vsub.f32 %v1498, %v949
    %v1515 = vpack.c.bf16 %v1500, %v1499
    %v1516 = vpack.c.bf16 %v1502, %v1501
    %v1517 = vpack.c.bf16 %v1504, %v1503
    %v1518 = vpack.c.bf16 %v1506, %v1505
    %v1519 = vpack.c.bf16 %v1508, %v1507
    %v1520 = vpack.c.bf16 %v1510, %v1509
    %v1521 = vpack.c.bf16 %v1512, %v1511
    %v1522 = vpack.c.bf16 %v1514, %v1513
    %s1523 = scalar_lea.vmem [#allocation8], 128
    %v1524 = vld [vmem:[%s1523] sm:$0xf]
    %v1525 = vld [vmem:[%s1523 + $0x4] sm:$0xf]
    %v1526 = vld [vmem:[%s1523 + $0x8] sm:$0xf]
    %v1527 = vld [vmem:[%s1523 + $0xc] sm:$0xf]
    %v1528 = vld [vmem:[%s1523 + $0x10] sm:$0xf]
    %v1529 = vld [vmem:[%s1523 + $0x14] sm:$0xf]
    %v1530 = vld [vmem:[%s1523 + $0x18] sm:$0xf]
    %v1531 = vld [vmem:[%s1523 + $0x1c] sm:$0xf]
    %v1532 = vld [vmem:[%s1523 + $0x20] sm:$0xf]
    %v1533 = vld [vmem:[%s1523 + $0x24] sm:$0xf]
    %v1534 = vld [vmem:[%s1523 + $0x28] sm:$0xf]
    %v1535 = vld [vmem:[%s1523 + $0x2c] sm:$0xf]
    %v1536 = vld [vmem:[%s1523 + $0x30] sm:$0xf]
    %v1537 = vld [vmem:[%s1523 + $0x34] sm:$0xf]
    %v1538 = vld [vmem:[%s1523 + $0x38] sm:$0xf]
    %v1539 = vld [vmem:[%s1523 + $0x3c] sm:$0xf]
    %v1556 = vunpack.c.l.b16 %v1524
    %v1557 = vunpack.c.l.b16 %v1525
    %v1558 = vunpack.c.l.b16 %v1526
    %v1559 = vunpack.c.l.b16 %v1527
    %v1560 = vunpack.c.l.b16 %v1528
    %v1561 = vunpack.c.l.b16 %v1529
    %v1562 = vunpack.c.l.b16 %v1530
    %v1563 = vunpack.c.l.b16 %v1531
    %v1564 = vunpack.c.l.b16 %v1532
    %v1565 = vunpack.c.l.b16 %v1533
    %v1566 = vunpack.c.l.b16 %v1534
    %v1567 = vunpack.c.l.b16 %v1535
    %v1568 = vunpack.c.l.b16 %v1536
    %v1569 = vunpack.c.l.b16 %v1537
    %v1570 = vunpack.c.l.b16 %v1538
    %v1571 = vunpack.c.l.b16 %v1539
    %v1572 = vpack.c.b16 %v1557, %v1556
    %v1573 = vpack.c.b16 %v1559, %v1558
    %v1574 = vpack.c.b16 %v1561, %v1560
    %v1575 = vpack.c.b16 %v1563, %v1562
    %v1576 = vpack.c.b16 %v1565, %v1564
    %v1577 = vpack.c.b16 %v1567, %v1566
    %v1578 = vpack.c.b16 %v1569, %v1568
    %v1579 = vpack.c.b16 %v1571, %v1570
    %1588 = vmatprep.subr.bf16.mxu0 0
    %1589 = vmatpush1.bf16.msra.mxu0 %v1572
    %1590 = vmatprep.subr.bf16.mxu0 0
    %1591 = vmatpush1.bf16.msra.mxu0 %v1573
    %1592 = vmatprep.subr.bf16.mxu0 0
    %1593 = vmatpush1.bf16.msra.mxu0 %v1574
    %1594 = vmatprep.subr.bf16.mxu0 0
    %1595 = vmatpush1.bf16.msra.mxu0 %v1575
    %1596 = vmatprep.subr.bf16.mxu0 0
    %1597 = vmatpush1.bf16.msra.mxu0 %v1576
    %1598 = vmatprep.subr.bf16.mxu0 0
    %1599 = vmatpush1.bf16.msra.mxu0 %v1577
    %1600 = vmatprep.subr.bf16.mxu0 0
    %1601 = vmatpush1.bf16.msra.mxu0 %v1578
    %1602 = vmatprep.subr.bf16.mxu0 0
    %1603 = vmatpush1.bf16.msra.mxu0 %v1579
    %1604 = vmatprep.subr.bf16.mxu0 0
    %1605 = vmatpush1.bf16.msra.mxu0 0
    %1606 = vmatprep.subr.bf16.mxu0 0
    %1607 = vmatpush1.bf16.msra.mxu0 0
    %1608 = vmatprep.subr.bf16.mxu0 0
    %1609 = vmatpush1.bf16.msra.mxu0 0
    %1610 = vmatprep.subr.bf16.mxu0 0
    %1611 = vmatpush1.bf16.msra.mxu0 0
    %1612 = vmatprep.subr.bf16.mxu0 0
    %1613 = vmatpush1.bf16.msra.mxu0 0
    %1614 = vmatprep.subr.bf16.mxu0 0
    %1615 = vmatpush1.bf16.msra.mxu0 0
    %1616 = vmatprep.subr.bf16.mxu0 0
    %1617 = vmatpush1.bf16.msra.mxu0 0
    %1618 = vmatprep.subr.bf16.mxu0 0
    %1619 = vmatpush1.bf16.msra.mxu0 0
    %1620 = vmatprep.mubr.bf16.mxu0 0
    %1621 = vmatmul.mubr.bf16.gmra.mrb[0].mxu0 %v1515
    %v1622 = vpop.f32.mrb[0].mxu0
    %v1623 = vadd.f32 0.0, %v1622
    %v1624 = vpop.f32.mrb[0].mxu0
    %v1625 = vpop.f32.mrb[0].mxu0
    %v1626 = vadd.f32 0.0, %v1625
    %v1627 = vpop.f32.mrb[0].mxu0
    %1628 = vmatprep.mubr.bf16.mxu0 0
    %1629 = vmatmul.mubr.bf16.gmra.mrb[0].mxu0 %v1516
    %v1630 = vpop.f32.mrb[0].mxu0
    %v1631 = vadd.f32 0.0, %v1630
    %v1632 = vpop.f32.mrb[0].mxu0
    %v1633 = vpop.f32.mrb[0].mxu0
    %v1634 = vadd.f32 0.0, %v1633
    %v1635 = vpop.f32.mrb[0].mxu0
    %1636 = vmatprep.mubr.bf16.mxu0 0
    %1637 = vmatmul.mubr.bf16.gmra.mrb[0].mxu0 %v1517
    %v1638 = vpop.f32.mrb[0].mxu0
    %v1639 = vadd.f32 0.0, %v1638
    %v1640 = vpop.f32.mrb[0].mxu0
    %v1641 = vpop.f32.mrb[0].mxu0
    %v1642 = vadd.f32 0.0, %v1641
    %v1643 = vpop.f32.mrb[0].mxu0
    %1644 = vmatprep.mubr.bf16.mxu0 0
    %1645 = vmatmul.mubr.bf16.gmra.mrb[0].mxu0 %v1518
    %v1646 = vpop.f32.mrb[0].mxu0
    %v1647 = vadd.f32 0.0, %v1646
    %v1648 = vpop.f32.mrb[0].mxu0
    %v1649 = vpop.f32.mrb[0].mxu0
    %v1650 = vadd.f32 0.0, %v1649
    %v1651 = vpop.f32.mrb[0].mxu0
    %1652 = vmatprep.mubr.bf16.mxu0 0
    %1653 = vmatmul.mubr.bf16.gmra.mrb[0].mxu0 %v1519
    %v1654 = vpop.f32.mrb[0].mxu0
    %v1655 = vadd.f32 0.0, %v1654
    %v1656 = vpop.f32.mrb[0].mxu0
    %v1657 = vpop.f32.mrb[0].mxu0
    %v1658 = vadd.f32 0.0, %v1657
    %v1659 = vpop.f32.mrb[0].mxu0
    %1660 = vmatprep.mubr.bf16.mxu0 0
    %1661 = vmatmul.mubr.bf16.gmra.mrb[0].mxu0 %v1520
    %v1662 = vpop.f32.mrb[0].mxu0
    %v1663 = vadd.f32 0.0, %v1662
    %v1664 = vpop.f32.mrb[0].mxu0
    %v1665 = vpop.f32.mrb[0].mxu0
    %v1666 = vadd.f32 0.0, %v1665
    %v1667 = vpop.f32.mrb[0].mxu0
    %1668 = vmatprep.mubr.bf16.mxu0 0
    %1669 = vmatmul.mubr.bf16.gmra.mrb[0].mxu0 %v1521
    %v1670 = vpop.f32.mrb[0].mxu0
    %v1671 = vadd.f32 0.0, %v1670
    %v1672 = vpop.f32.mrb[0].mxu0
    %v1673 = vpop.f32.mrb[0].mxu0
    %v1674 = vadd.f32 0.0, %v1673
    %v1675 = vpop.f32.mrb[0].mxu0
    %1676 = vmatprep.mubr.bf16.mxu0 0
    %1677 = vmatmul.mubr.bf16.gmra.mrb[0].mxu0 %v1522
    %v1678 = vpop.f32.mrb[0].mxu0
    %v1679 = vadd.f32 0.0, %v1678
    %v1680 = vpop.f32.mrb[0].mxu0
    %v1681 = vpop.f32.mrb[0].mxu0
    %v1682 = vadd.f32 0.0, %v1681
    %v1683 = vpop.f32.mrb[0].mxu0
    %1684 = vdwg.mxu0
    %v1685 = vadd.f32 %v1324, %v1623
    %v1686 = vadd.f32 %v1327, %v1626
    %v1687 = vadd.f32 %v1332, %v1631
    %v1688 = vadd.f32 %v1335, %v1634
    %v1689 = vadd.f32 %v1340, %v1639
    %v1690 = vadd.f32 %v1343, %v1642
    %v1691 = vadd.f32 %v1348, %v1647
    %v1692 = vadd.f32 %v1351, %v1650
    %v1693 = vadd.f32 %v1356, %v1655
    %v1694 = vadd.f32 %v1359, %v1658
    %v1695 = vadd.f32 %v1364, %v1663
    %v1696 = vadd.f32 %v1367, %v1666
    %v1697 = vadd.f32 %v1372, %v1671
    %v1698 = vadd.f32 %v1375, %v1674
    %v1699 = vadd.f32 %v1380, %v1679
    %v1700 = vadd.f32 %v1383, %v1682
    %v1701 = vld [vmem:[%s5] sm:$0x1]
    %v1703 = vlaneseq
    %v1704 = vshrl.u32 %v1703, 7
    %v1705 = vsub.s32 0, %v1704
    %v1706 = vrot.slane %v1701, %v1705
    %v1708 = vadd.f32 %v1685, %v1706
    %v1709 = vadd.f32 %v1686, %v1706
    %v1710 = vadd.f32 %v1687, %v1706
    %v1711 = vadd.f32 %v1688, %v1706
    %v1712 = vadd.f32 %v1689, %v1706
    %v1713 = vadd.f32 %v1690, %v1706
    %v1714 = vadd.f32 %v1691, %v1706
    %v1715 = vadd.f32 %v1692, %v1706
    %v1716 = vadd.f32 %v1693, %v1706
    %v1717 = vadd.f32 %v1694, %v1706
    %v1718 = vadd.f32 %v1695, %v1706
    %v1719 = vadd.f32 %v1696, %v1706
    %v1720 = vadd.f32 %v1697, %v1706
    %v1721 = vadd.f32 %v1698, %v1706
    %v1722 = vadd.f32 %v1699, %v1706
    %v1723 = vadd.f32 %v1700, %v1706
    %1724 = vst [vmem:[#allocation10] sm:$0xff] %v1708
    %1725 = vst [vmem:[#allocation10 + $0x8] sm:$0xff] %v1709
    %1726 = vst [vmem:[#allocation10 + $0x10] sm:$0xff] %v1710
    %1727 = vst [vmem:[#allocation10 + $0x18] sm:$0xff] %v1711
    %1728 = vst [vmem:[#allocation10 + $0x20] sm:$0xff] %v1712
    %1729 = vst [vmem:[#allocation10 + $0x28] sm:$0xff] %v1713
    %1730 = vst [vmem:[#allocation10 + $0x30] sm:$0xff] %v1714
    %1731 = vst [vmem:[#allocation10 + $0x38] sm:$0xff] %v1715
    %1732 = vst [vmem:[#allocation10 + $0x40] sm:$0xff] %v1716
    %1733 = vst [vmem:[#allocation10 + $0x48] sm:$0xff] %v1717
    %1734 = vst [vmem:[#allocation10 + $0x50] sm:$0xff] %v1718
    %1735 = vst [vmem:[#allocation10 + $0x58] sm:$0xff] %v1719
    %1736 = vst [vmem:[#allocation10 + $0x60] sm:$0xff] %v1720
    %1737 = vst [vmem:[#allocation10 + $0x68] sm:$0xff] %v1721
    %1738 = vst [vmem:[#allocation10 + $0x70] sm:$0xff] %v1722
    %1739 = vst [vmem:[#allocation10 + $0x78] sm:$0xff] %v1723
    // Predicated region
    $region42: #{tpu_custom_call.1} parent=1 // pred_check
      _
    $region43: #{tpu_custom_call.1} parent=1 // pred_check_branch
      %1741 = sbr.rel (0) target = $region45
    $region44: #{tpu_custom_call.1} parent=1 // pred_region
      %s1743 = ssub.s32 2048, 2048
      %1744 = vsyncadd [#allocation4], %s1743
      %s1745 = sshll.u32 [#allocation10], 4
      %s1746 = int_to_ptr.vmem [resolvable:$true] %s1745
      %1751 = dma.vmem_to_hbm [thread:$0]  %s1746, 2048, %s6, [#allocation4], 128, 128, 8
    $region45: #{tpu_custom_call.1} parent=1 // pred_fallthru
      _
    // Predicated region
    $region46: #{tpu_custom_call.1} parent=1 // pred_check
      _
    $region47: #{tpu_custom_call.1} parent=1 // pred_check_branch
      %1753 = sbr.rel (0) target = $region49
    $region48: #{tpu_custom_call.1} parent=1 // pred_region
      %1754 = dma.done [#allocation4], 2048
    $region49: #{tpu_custom_call.1} parent=1 // pred_fallthru
      _
    %1755 = vsyncpa [#allocation3], 1
    %1756 = vsyncpa [#allocation6], 1
    %1757 = vsyncpa [#allocation9], 1
    %1758 = vsyncpa [#allocation4], 1

</llo_original>
